<compile_context>
chip_gen: v5e
topology: v5e:2x2
jax: 0.10.0
libtpu: 0.0.40
codegen_flags: <defaults>
</compile_context>

<pallas_src>
import jax
import jax.numpy as jnp
from jax.experimental import pallas as pl
from jax.experimental.pallas import tpu as pltpu

FEAT_DIM = 1280     # EfficientNet-b0 feature channels (b1=False, b2=False path)
STEM_CH = 32        # EfficientNet-b0 stem channels
CC_PAD = 16         # space-to-depth channels (4*C = 12) padded to 16
HEAD_CHUNK = 256    # head columns processed per in-kernel chunk (5 chunks of 1280)
TM_TARGET = 1024    # target number of output pixels per grid step


def _largest_divisor_leq(n, cap):
    cap = max(1, min(n, cap))
    for d in range(cap, 0, -1):
        if n % d == 0:
            return d
    return 1


def _pick_swish_dtype():
    # bf16 VPU/EUP exists on v6e/v7x; keep f32 elsewhere (v5e: f32-only VPU/EUP).
    try:
        kind = jax.devices()[0].device_kind.lower()
    except Exception:
        return jnp.float32
    if ("v6" in kind) or ("v7" in kind) or ("trillium" in kind):
        return jnp.bfloat16
    return jnp.float32


def _swish(y, compute_dtype):
    """y * sigmoid(y).  f32 path sends the divide to the EUP via the approx
    reciprocal; bf16 path keeps the whole elementwise chain in bf16."""
    if compute_dtype == jnp.float32:
        return y * pl.reciprocal(1.0 + jnp.exp(-y), approx=True)
    yb = y.astype(compute_dtype)
    return yb * (1.0 / (1.0 + jnp.exp(-yb)))


# ---------------- Fused Pallas kernel ----------------

def _make_fused_kernel(th, wo, hw, swish_dtype):
    """In-kernel stem conv (4 shifted matmuls over the s2d image) + swish ->
    chunked 1x1 head conv + swish + global-avg-pool accumulation."""
    tm = th * wo

    def kernel(x_ref, wq_ref, bs_ref, wh_ref, bh_ref, o_ref, acc_ref):
        t = pl.program_id(1)

        @pl.when(t == 0)
        def _():
            acc_ref[...] = jnp.zeros_like(acc_ref)

        r0 = t * th   # first output row of this tile

        # --- stem 3x3 stride-2 conv, folded in-kernel: 4 parity windows of the
        # space-to-depth image, each a (tm, CC_PAD) x (CC_PAD, 32) matmul ---
        s = jnp.zeros((tm, STEM_CH), jnp.float32)
        for qi, (qy, qx) in enumerate(((0, 0), (0, 1), (1, 0), (1, 1))):
            win = x_ref[0, pl.ds(r0 + qy, th), pl.ds(qx, wo), :]      # (th, wo, CC_PAD) f32
            win = win.reshape(tm, CC_PAD).astype(jnp.bfloat16)
            s = s + jnp.dot(win, wq_ref[qi], preferred_element_type=jnp.float32)
        s = _swish(s + bs_ref[...], swish_dtype).astype(jnp.bfloat16)  # (tm, 32)

        # --- head 1x1 conv to 1280 + swish + avg-pool accumulation, chunked over
        # output channels so the (tm, 1280) f32 tile is never materialized ---
        for c0 in range(0, FEAT_DIM, HEAD_CHUNK):
            hc = jnp.dot(s, wh_ref[:, c0:c0 + HEAD_CHUNK],
                         preferred_element_type=jnp.float32)           # (tm, 256) f32
            hc = _swish(hc + bh_ref[:, c0:c0 + HEAD_CHUNK], swish_dtype)
            acc_ref[:, c0:c0 + HEAD_CHUNK] += jnp.sum(
                hc.astype(jnp.float32), axis=0, keepdims=True)

        # --- finalize: mean over the full spatial extent (F.avg_pool2d) ---
        @pl.when(t == pl.num_programs(1) - 1)
        def _():
            o_ref[...] = (acc_ref[...] * (1.0 / hw)).reshape(1, 1, FEAT_DIM)

    return kernel


# ---------------- Parameters (deterministic, synthetic) ----------------

def init_params(key, in_ch=3, output_size=4):
    ks = jax.random.split(key, 6)
    p = {}
    # EfficientNet-b0 stem: 3x3 stride-2 conv (BN folded into the bias) + swish.
    p["w_stem"] = jax.random.normal(ks[0], (3, 3, in_ch, STEM_CH), jnp.float32) * 0.1
    p["b_stem"] = jax.random.normal(ks[1], (1, STEM_CH), jnp.float32) * 0.01
    # EfficientNet-b0 head: 1x1 conv to 1280 channels + swish.
    p["w_head"] = jax.random.normal(ks[2], (STEM_CH, FEAT_DIM), jnp.float32) * 0.05
    p["b_head"] = jax.random.normal(ks[3], (1, FEAT_DIM), jnp.float32) * 0.01
    # self.classification = nn.Linear(1280, output_size)
    p["w_cls"] = jax.random.normal(ks[4], (FEAT_DIM, output_size), jnp.float32) * 0.02
    p["b_cls"] = jax.random.normal(ks[5], (1, output_size), jnp.float32) * 0.01
    return p


# ---------------- Forward (mirrors EfficientNetwork.forward, b0 path) ----------------

def efficient_network_forward(params, image_nchw):
    n, c, h, w = image_nchw.shape
    assert h % 2 == 0 and w % 2 == 0, "stride-2 'same' stem assumes even H/W"
    ho, wo = h // 2, w // 2
    hw = ho * wo
    cc = 4 * c
    swish_dtype = _pick_swish_dtype()

    # --- space-to-depth-2 of the TF-'same'-padded NHWC image.  Layout plumbing
    # only (~1x the input size); the im2col expansion never touches HBM. ---
    x = jnp.transpose(image_nchw, (0, 2, 3, 1)).astype(jnp.float32)    # NHWC
    x = jnp.pad(x, ((0, 0), (0, 2), (0, 2), (0, 0)))                   # bottom/right pad
    hs, ws = ho + 1, wo + 1
    x = x.reshape(n, hs, 2, ws, 2, c)
    x = jnp.transpose(x, (0, 1, 3, 2, 4, 5)).reshape(n, hs, ws, cc)    # (dy, dx, c) packing
    x = jnp.pad(x, ((0, 0), (0, 0), (0, 0), (0, CC_PAD - cc)))         # channels 12 -> 16

    # --- stem weights regrouped per (qy, qx) parity window; the slots for the
    # nonexistent taps ky==3 / kx==3 stay zero, so the extra padded image
    # row/col contributes nothing to the conv. ---
    w_stem = params["w_stem"]                                          # (3, 3, C, 32)
    wq = jnp.zeros((2, 2, 2, 2, c, STEM_CH), jnp.float32)
    for ky in range(3):
        for kx in range(3):
            wq = wq.at[ky // 2, kx // 2, ky % 2, kx % 2].set(w_stem[ky, kx])
    wq = wq.reshape(4, cc, STEM_CH)
    wq = jnp.pad(wq, ((0, 0), (0, CC_PAD - cc), (0, 0))).astype(jnp.bfloat16)

    w_head = params["w_head"].astype(jnp.bfloat16)

    # Row tiling over output rows; th divides Ho exactly -> no padded-row masking.
    th = _largest_divisor_leq(ho, max(1, TM_TARGET // wo))
    n_tiles = ho // th

    # TODO(synk): the 16 pretrained MBConv blocks of EfficientNet-b0 are omitted
    # (pretrained weights cannot be loaded in-script); stem + 1x1 head conv stand
    # in so the feature map has the exact (N, 1280, Ho, Wo) shape forward expects.
    kernel = _make_fused_kernel(th, wo, hw, swish_dtype)
    pooled = pl.pallas_call(
        kernel,
        out_shape=jax.ShapeDtypeStruct((n, 1, FEAT_DIM), jnp.float32),
        grid=(n, n_tiles),
        in_specs=[
            # whole space-to-depth image per batch element (block index constant
            # over t, so it is DMA'd once per image):
            pl.BlockSpec((1, hs, ws, CC_PAD), lambda i, t: (i, 0, 0, 0)),
            # pinned weights/biases (constant index; re-fetch is skipped):
            pl.BlockSpec((4, CC_PAD, STEM_CH), lambda i, t: (0, 0, 0)),   # stem taps
            pl.BlockSpec((1, STEM_CH), lambda i, t: (0, 0)),              # stem bias
            pl.BlockSpec((STEM_CH, FEAT_DIM), lambda i, t: (0, 0)),       # head weight
            pl.BlockSpec((1, FEAT_DIM), lambda i, t: (0, 0)),             # head bias
        ],
        out_specs=pl.BlockSpec((1, 1, FEAT_DIM), lambda i, t: (i, 0, 0)),
        scratch_shapes=[pltpu.VMEM((1, FEAT_DIM), jnp.float32)],          # pool accumulator
        compiler_params=pltpu.CompilerParams(
            dimension_semantics=("parallel", "arbitrary"),
            vmem_limit_bytes=32 * 1024 * 1024),
    )(x, wq, params["b_stem"], w_head, params["b_head"])

    pooled = pooled[:, 0, :]                                            # (N, 1280) f32
    # Classifier (nn.Linear(1280, output_size)) in plain XLA: an M=1 matmul per
    # image is not worth pinning a 640 KB f32 weight in VMEM.
    return pooled @ params["w_cls"] + params["b_cls"]


if __name__ == "__main__":
    key = jax.random.PRNGKey(0)
    k_img, k_par = jax.random.split(key)

    # Small NCHW input, consistent with the PyTorch module's image input.
    image = jax.random.normal(k_img, (2, 3, 16, 16), jnp.float32)
    params = init_params(k_par, in_ch=3, output_size=4)

    out = jax.jit(efficient_network_forward)(params, image)
    out = jax.block_until_ready(out)
    assert out.shape == (2, 4), out.shape
    assert out.dtype == jnp.float32
    print("KERNEL_OK")
</pallas_src>

<mosaic_0001>
module attributes {stable_mosaic.version = 11 : i64} {
  func.func @kernel(%arg0: i32, %arg1: i32, %arg2: memref<1x9x9x16xf32, #tpu.memory_space<vmem>>, %arg3: memref<4x16x32xbf16, #tpu.memory_space<vmem>>, %arg4: memref<1x32xf32, #tpu.memory_space<vmem>>, %arg5: memref<32x1280xbf16, #tpu.memory_space<vmem>>, %arg6: memref<1x1280xf32, #tpu.memory_space<vmem>>, %arg7: memref<1x1x1280xf32, #tpu.memory_space<vmem>>, %arg8: memref<1x1280xf32, #tpu.memory_space<vmem>>) attributes {dimension_semantics = [#tpu.dimension_semantics<parallel>, #tpu.dimension_semantics<arbitrary>], iteration_bounds = array<i64: 2, 1>, scalar_prefetch = 0 : i64, scratch_operands = 1 : i64, tpu.core_type = #tpu.core_type<tc>, window_params = [{transform_indices = @transform_0, window_bounds = array<i64: 1, 9, 9, 16>}, {pipeline_mode = #tpu.pipeline_mode<synchronous>, transform_indices = @transform_1, window_bounds = array<i64: 4, 16, 32>}, {pipeline_mode = #tpu.pipeline_mode<synchronous>, transform_indices = @transform_2, window_bounds = array<i64: 1, 32>}, {pipeline_mode = #tpu.pipeline_mode<synchronous>, transform_indices = @transform_3, window_bounds = array<i64: 32, 1280>}, {pipeline_mode = #tpu.pipeline_mode<synchronous>, transform_indices = @transform_4, window_bounds = array<i64: 1, 1280>}, {transform_indices = @transform_5, window_bounds = array<i64: 1, 1, 1280>}]} {
    %c0_i32 = arith.constant 0 : i32
    %0 = arith.cmpi eq, %arg1, %c0_i32 : i32
    %1 = arith.extui %0 : i1 to i32
    %c0_i32_0 = arith.constant 0 : i32
    %2 = arith.cmpi ne, %1, %c0_i32_0 : i32
    scf.if %2 {
      %cst_90 = arith.constant 0.000000e+00 : f32
      %144 = vector.broadcast %cst_90 : f32 to vector<1x1280xf32>
      %c0_91 = arith.constant 0 : index
      %c0_92 = arith.constant 0 : index
      %145 = vector.load %arg8[%c0_91, %c0_92] : memref<1x1280xf32, #tpu.memory_space<vmem>>, vector<1x1280xf32>
      tpu.vector_store %arg8[%c0_91, %c0_92], %144 {strides = array<i32>} : memref<1x1280xf32, #tpu.memory_space<vmem>>, vector<1x1280xf32>,
    } else {
    }
    %c8_i32 = arith.constant 8 : i32
    %3 = arith.muli %arg1, %c8_i32 : i32
    %cst = arith.constant 0.000000e+00 : f32
    %4 = vector.broadcast %cst : f32 to vector<64x32xf32>
    %c0_i32_1 = arith.constant 0 : i32
    %5 = arith.addi %3, %c0_i32_1 : i32
    %c0 = arith.constant 0 : index
    %6 = arith.index_cast %5 : i32 to index
    %c0_2 = arith.constant 0 : index
    %c0_3 = arith.constant 0 : index
    %7 = vector.load %arg2[%c0, %6, %c0_2, %c0_3] : memref<1x9x9x16xf32, #tpu.memory_space<vmem>>, vector<1x8x8x16xf32>
    %8 = vector.shape_cast %7 : vector<1x8x8x16xf32> to vector<8x8x16xf32>
    %9 = vector.shape_cast %8 : vector<8x8x16xf32> to vector<64x16xf32>
    %10 = arith.truncf %9 : vector<64x16xf32> to vector<64x16xbf16>
    %c0_4 = arith.constant 0 : index
    %c0_5 = arith.constant 0 : index
    %c0_6 = arith.constant 0 : index
    %11 = vector.load %arg3[%c0_4, %c0_5, %c0_6] : memref<4x16x32xbf16, #tpu.memory_space<vmem>>, vector<1x16x32xbf16>
    %12 = vector.shape_cast %11 : vector<1x16x32xbf16> to vector<16x32xbf16>
    %cst_7 = arith.constant dense<0.000000e+00> : vector<64x32xf32>
    %13 = tpu.matmul %10, %12, %cst_7 {dimension_numbers = #tpu.dot_dimension_numbers<[1], [0], [0], [1], [0, 0, 1, 1], [], []>} : vector<64x16xbf16>, vector<16x32xbf16>, vector<64x32xf32> -> vector<64x32xf32>
    %14 = arith.addf %4, %13 : vector<64x32xf32>
    %c0_i32_8 = arith.constant 0 : i32
    %15 = arith.addi %3, %c0_i32_8 : i32
    %c0_9 = arith.constant 0 : index
    %16 = arith.index_cast %15 : i32 to index
    %c1 = arith.constant 1 : index
    %c0_10 = arith.constant 0 : index
    %17 = vector.load %arg2[%c0_9, %16, %c1, %c0_10] : memref<1x9x9x16xf32, #tpu.memory_space<vmem>>, vector<1x8x8x16xf32>
    %18 = vector.shape_cast %17 : vector<1x8x8x16xf32> to vector<8x8x16xf32>
    %19 = vector.shape_cast %18 : vector<8x8x16xf32> to vector<64x16xf32>
    %20 = arith.truncf %19 : vector<64x16xf32> to vector<64x16xbf16>
    %c1_11 = arith.constant 1 : index
    %c0_12 = arith.constant 0 : index
    %c0_13 = arith.constant 0 : index
    %21 = vector.load %arg3[%c1_11, %c0_12, %c0_13] : memref<4x16x32xbf16, #tpu.memory_space<vmem>>, vector<1x16x32xbf16>
    %22 = vector.shape_cast %21 : vector<1x16x32xbf16> to vector<16x32xbf16>
    %cst_14 = arith.constant dense<0.000000e+00> : vector<64x32xf32>
    %23 = tpu.matmul %20, %22, %cst_14 {dimension_numbers = #tpu.dot_dimension_numbers<[1], [0], [0], [1], [0, 0, 1, 1], [], []>} : vector<64x16xbf16>, vector<16x32xbf16>, vector<64x32xf32> -> vector<64x32xf32>
    %24 = arith.addf %14, %23 : vector<64x32xf32>
    %c1_i32 = arith.constant 1 : i32
    %25 = arith.addi %3, %c1_i32 : i32
    %c0_15 = arith.constant 0 : index
    %26 = arith.index_cast %25 : i32 to index
    %c0_16 = arith.constant 0 : index
    %c0_17 = arith.constant 0 : index
    %27 = vector.load %arg2[%c0_15, %26, %c0_16, %c0_17] : memref<1x9x9x16xf32, #tpu.memory_space<vmem>>, vector<1x8x8x16xf32>
    %28 = vector.shape_cast %27 : vector<1x8x8x16xf32> to vector<8x8x16xf32>
    %29 = vector.shape_cast %28 : vector<8x8x16xf32> to vector<64x16xf32>
    %30 = arith.truncf %29 : vector<64x16xf32> to vector<64x16xbf16>
    %c2 = arith.constant 2 : index
    %c0_18 = arith.constant 0 : index
    %c0_19 = arith.constant 0 : index
    %31 = vector.load %arg3[%c2, %c0_18, %c0_19] : memref<4x16x32xbf16, #tpu.memory_space<vmem>>, vector<1x16x32xbf16>
    %32 = vector.shape_cast %31 : vector<1x16x32xbf16> to vector<16x32xbf16>
    %cst_20 = arith.constant dense<0.000000e+00> : vector<64x32xf32>
    %33 = tpu.matmul %30, %32, %cst_20 {dimension_numbers = #tpu.dot_dimension_numbers<[1], [0], [0], [1], [0, 0, 1, 1], [], []>} : vector<64x16xbf16>, vector<16x32xbf16>, vector<64x32xf32> -> vector<64x32xf32>
    %34 = arith.addf %24, %33 : vector<64x32xf32>
    %c1_i32_21 = arith.constant 1 : i32
    %35 = arith.addi %3, %c1_i32_21 : i32
    %c0_22 = arith.constant 0 : index
    %36 = arith.index_cast %35 : i32 to index
    %c1_23 = arith.constant 1 : index
    %c0_24 = arith.constant 0 : index
    %37 = vector.load %arg2[%c0_22, %36, %c1_23, %c0_24] : memref<1x9x9x16xf32, #tpu.memory_space<vmem>>, vector<1x8x8x16xf32>
    %38 = vector.shape_cast %37 : vector<1x8x8x16xf32> to vector<8x8x16xf32>
    %39 = vector.shape_cast %38 : vector<8x8x16xf32> to vector<64x16xf32>
    %40 = arith.truncf %39 : vector<64x16xf32> to vector<64x16xbf16>
    %c3 = arith.constant 3 : index
    %c0_25 = arith.constant 0 : index
    %c0_26 = arith.constant 0 : index
    %41 = vector.load %arg3[%c3, %c0_25, %c0_26] : memref<4x16x32xbf16, #tpu.memory_space<vmem>>, vector<1x16x32xbf16>
    %42 = vector.shape_cast %41 : vector<1x16x32xbf16> to vector<16x32xbf16>
    %cst_27 = arith.constant dense<0.000000e+00> : vector<64x32xf32>
    %43 = tpu.matmul %40, %42, %cst_27 {dimension_numbers = #tpu.dot_dimension_numbers<[1], [0], [0], [1], [0, 0, 1, 1], [], []>} : vector<64x16xbf16>, vector<16x32xbf16>, vector<64x32xf32> -> vector<64x32xf32>
    %44 = arith.addf %34, %43 : vector<64x32xf32>
    %c0_28 = arith.constant 0 : index
    %c0_29 = arith.constant 0 : index
    %45 = vector.load %arg4[%c0_28, %c0_29] : memref<1x32xf32, #tpu.memory_space<vmem>>, vector<1x32xf32>
    %46 = vector.broadcast %45 : vector<1x32xf32> to vector<64x32xf32>
    %47 = arith.addf %44, %46 : vector<64x32xf32>
    %cst_30 = arith.constant 0.000000e+00 : f32
    %48 = vector.broadcast %cst_30 : f32 to vector<64x32xf32>
    %49 = arith.subf %48, %47 : vector<64x32xf32>
    %50 = math.exp %49 : vector<64x32xf32>
    %cst_31 = arith.constant 1.000000e+00 : f32
    %51 = vector.broadcast %cst_31 : f32 to vector<64x32xf32>
    %52 = arith.addf %51, %50 : vector<64x32xf32>
    %53 = tpu.reciprocal %52 {approx = true} : vector<64x32xf32> -> vector<64x32xf32>
    %54 = arith.mulf %47, %53 : vector<64x32xf32>
    %55 = arith.truncf %54 : vector<64x32xf32> to vector<64x32xbf16>
    %c0_32 = arith.constant 0 : index
    %c0_33 = arith.constant 0 : index
    %56 = vector.load %arg5[%c0_32, %c0_33] : memref<32x1280xbf16, #tpu.memory_space<vmem>>, vector<32x256xbf16>
    %cst_34 = arith.constant dense<0.000000e+00> : vector<64x256xf32>
    %57 = tpu.matmul %55, %56, %cst_34 {dimension_numbers = #tpu.dot_dimension_numbers<[1], [0], [0], [1], [0, 0, 1, 1], [], []>} : vector<64x32xbf16>, vector<32x256xbf16>, vector<64x256xf32> -> vector<64x256xf32>
    %c0_35 = arith.constant 0 : index
    %c0_36 = arith.constant 0 : index
    %58 = vector.load %arg6[%c0_35, %c0_36] : memref<1x1280xf32, #tpu.memory_space<vmem>>, vector<1x256xf32>
    %59 = vector.broadcast %58 : vector<1x256xf32> to vector<64x256xf32>
    %60 = arith.addf %57, %59 : vector<64x256xf32>
    %cst_37 = arith.constant 0.000000e+00 : f32
    %61 = vector.broadcast %cst_37 : f32 to vector<64x256xf32>
    %62 = arith.subf %61, %60 : vector<64x256xf32>
    %63 = math.exp %62 : vector<64x256xf32>
    %cst_38 = arith.constant 1.000000e+00 : f32
    %64 = vector.broadcast %cst_38 : f32 to vector<64x256xf32>
    %65 = arith.addf %64, %63 : vector<64x256xf32>
    %66 = tpu.reciprocal %65 {approx = true} : vector<64x256xf32> -> vector<64x256xf32>
    %67 = arith.mulf %60, %66 : vector<64x256xf32>
    %c0_39 = arith.constant 0 : index
    %c0_40 = arith.constant 0 : index
    %68 = vector.load %arg8[%c0_39, %c0_40] : memref<1x1280xf32, #tpu.memory_space<vmem>>, vector<1x256xf32>
    %cst_41 = arith.constant dense<0.000000e+00> : vector<256xf32>
    %69 = vector.multi_reduction <add>, %67, %cst_41 [0] : vector<64x256xf32> to vector<256xf32>
    %70 = vector.shape_cast %69 : vector<256xf32> to vector<1x256xf32>
    %71 = arith.addf %68, %70 : vector<1x256xf32>
    %c0_42 = arith.constant 0 : index
    %c0_43 = arith.constant 0 : index
    %72 = vector.load %arg8[%c0_42, %c0_43] : memref<1x1280xf32, #tpu.memory_space<vmem>>, vector<1x256xf32>
    tpu.vector_store %arg8[%c0_42, %c0_43], %71 {strides = array<i32>} : memref<1x1280xf32, #tpu.memory_space<vmem>>, vector<1x256xf32>,
    %c0_44 = arith.constant 0 : index
    %c256 = arith.constant 256 : index
    %73 = vector.load %arg5[%c0_44, %c256] : memref<32x1280xbf16, #tpu.memory_space<vmem>>, vector<32x256xbf16>
    %cst_45 = arith.constant dense<0.000000e+00> : vector<64x256xf32>
    %74 = tpu.matmul %55, %73, %cst_45 {dimension_numbers = #tpu.dot_dimension_numbers<[1], [0], [0], [1], [0, 0, 1, 1], [], []>} : vector<64x32xbf16>, vector<32x256xbf16>, vector<64x256xf32> -> vector<64x256xf32>
    %c0_46 = arith.constant 0 : index
    %c256_47 = arith.constant 256 : index
    %75 = vector.load %arg6[%c0_46, %c256_47] : memref<1x1280xf32, #tpu.memory_space<vmem>>, vector<1x256xf32>
    %76 = vector.broadcast %75 : vector<1x256xf32> to vector<64x256xf32>
    %77 = arith.addf %74, %76 : vector<64x256xf32>
    %cst_48 = arith.constant 0.000000e+00 : f32
    %78 = vector.broadcast %cst_48 : f32 to vector<64x256xf32>
    %79 = arith.subf %78, %77 : vector<64x256xf32>
    %80 = math.exp %79 : vector<64x256xf32>
    %cst_49 = arith.constant 1.000000e+00 : f32
    %81 = vector.broadcast %cst_49 : f32 to vector<64x256xf32>
    %82 = arith.addf %81, %80 : vector<64x256xf32>
    %83 = tpu.reciprocal %82 {approx = true} : vector<64x256xf32> -> vector<64x256xf32>
    %84 = arith.mulf %77, %83 : vector<64x256xf32>
    %c0_50 = arith.constant 0 : index
    %c256_51 = arith.constant 256 : index
    %85 = vector.load %arg8[%c0_50, %c256_51] : memref<1x1280xf32, #tpu.memory_space<vmem>>, vector<1x256xf32>
    %cst_52 = arith.constant dense<0.000000e+00> : vector<256xf32>
    %86 = vector.multi_reduction <add>, %84, %cst_52 [0] : vector<64x256xf32> to vector<256xf32>
    %87 = vector.shape_cast %86 : vector<256xf32> to vector<1x256xf32>
    %88 = arith.addf %85, %87 : vector<1x256xf32>
    %c0_53 = arith.constant 0 : index
    %c256_54 = arith.constant 256 : index
    %89 = vector.load %arg8[%c0_53, %c256_54] : memref<1x1280xf32, #tpu.memory_space<vmem>>, vector<1x256xf32>
    tpu.vector_store %arg8[%c0_53, %c256_54], %88 {strides = array<i32>} : memref<1x1280xf32, #tpu.memory_space<vmem>>, vector<1x256xf32>,
    %c0_55 = arith.constant 0 : index
    %c512 = arith.constant 512 : index
    %90 = vector.load %arg5[%c0_55, %c512] : memref<32x1280xbf16, #tpu.memory_space<vmem>>, vector<32x256xbf16>
    %cst_56 = arith.constant dense<0.000000e+00> : vector<64x256xf32>
    %91 = tpu.matmul %55, %90, %cst_56 {dimension_numbers = #tpu.dot_dimension_numbers<[1], [0], [0], [1], [0, 0, 1, 1], [], []>} : vector<64x32xbf16>, vector<32x256xbf16>, vector<64x256xf32> -> vector<64x256xf32>
    %c0_57 = arith.constant 0 : index
    %c512_58 = arith.constant 512 : index
    %92 = vector.load %arg6[%c0_57, %c512_58] : memref<1x1280xf32, #tpu.memory_space<vmem>>, vector<1x256xf32>
    %93 = vector.broadcast %92 : vector<1x256xf32> to vector<64x256xf32>
    %94 = arith.addf %91, %93 : vector<64x256xf32>
    %cst_59 = arith.constant 0.000000e+00 : f32
    %95 = vector.broadcast %cst_59 : f32 to vector<64x256xf32>
    %96 = arith.subf %95, %94 : vector<64x256xf32>
    %97 = math.exp %96 : vector<64x256xf32>
    %cst_60 = arith.constant 1.000000e+00 : f32
    %98 = vector.broadcast %cst_60 : f32 to vector<64x256xf32>
    %99 = arith.addf %98, %97 : vector<64x256xf32>
    %100 = tpu.reciprocal %99 {approx = true} : vector<64x256xf32> -> vector<64x256xf32>
    %101 = arith.mulf %94, %100 : vector<64x256xf32>
    %c0_61 = arith.constant 0 : index
    %c512_62 = arith.constant 512 : index
    %102 = vector.load %arg8[%c0_61, %c512_62] : memref<1x1280xf32, #tpu.memory_space<vmem>>, vector<1x256xf32>
    %cst_63 = arith.constant dense<0.000000e+00> : vector<256xf32>
    %103 = vector.multi_reduction <add>, %101, %cst_63 [0] : vector<64x256xf32> to vector<256xf32>
    %104 = vector.shape_cast %103 : vector<256xf32> to vector<1x256xf32>
    %105 = arith.addf %102, %104 : vector<1x256xf32>
    %c0_64 = arith.constant 0 : index
    %c512_65 = arith.constant 512 : index
    %106 = vector.load %arg8[%c0_64, %c512_65] : memref<1x1280xf32, #tpu.memory_space<vmem>>, vector<1x256xf32>
    tpu.vector_store %arg8[%c0_64, %c512_65], %105 {strides = array<i32>} : memref<1x1280xf32, #tpu.memory_space<vmem>>, vector<1x256xf32>,
    %c0_66 = arith.constant 0 : index
    %c768 = arith.constant 768 : index
    %107 = vector.load %arg5[%c0_66, %c768] : memref<32x1280xbf16, #tpu.memory_space<vmem>>, vector<32x256xbf16>
    %cst_67 = arith.constant dense<0.000000e+00> : vector<64x256xf32>
    %108 = tpu.matmul %55, %107, %cst_67 {dimension_numbers = #tpu.dot_dimension_numbers<[1], [0], [0], [1], [0, 0, 1, 1], [], []>} : vector<64x32xbf16>, vector<32x256xbf16>, vector<64x256xf32> -> vector<64x256xf32>
    %c0_68 = arith.constant 0 : index
    %c768_69 = arith.constant 768 : index
    %109 = vector.load %arg6[%c0_68, %c768_69] : memref<1x1280xf32, #tpu.memory_space<vmem>>, vector<1x256xf32>
    %110 = vector.broadcast %109 : vector<1x256xf32> to vector<64x256xf32>
    %111 = arith.addf %108, %110 : vector<64x256xf32>
    %cst_70 = arith.constant 0.000000e+00 : f32
    %112 = vector.broadcast %cst_70 : f32 to vector<64x256xf32>
    %113 = arith.subf %112, %111 : vector<64x256xf32>
    %114 = math.exp %113 : vector<64x256xf32>
    %cst_71 = arith.constant 1.000000e+00 : f32
    %115 = vector.broadcast %cst_71 : f32 to vector<64x256xf32>
    %116 = arith.addf %115, %114 : vector<64x256xf32>
    %117 = tpu.reciprocal %116 {approx = true} : vector<64x256xf32> -> vector<64x256xf32>
    %118 = arith.mulf %111, %117 : vector<64x256xf32>
    %c0_72 = arith.constant 0 : index
    %c768_73 = arith.constant 768 : index
    %119 = vector.load %arg8[%c0_72, %c768_73] : memref<1x1280xf32, #tpu.memory_space<vmem>>, vector<1x256xf32>
    %cst_74 = arith.constant dense<0.000000e+00> : vector<256xf32>
    %120 = vector.multi_reduction <add>, %118, %cst_74 [0] : vector<64x256xf32> to vector<256xf32>
    %121 = vector.shape_cast %120 : vector<256xf32> to vector<1x256xf32>
    %122 = arith.addf %119, %121 : vector<1x256xf32>
    %c0_75 = arith.constant 0 : index
    %c768_76 = arith.constant 768 : index
    %123 = vector.load %arg8[%c0_75, %c768_76] : memref<1x1280xf32, #tpu.memory_space<vmem>>, vector<1x256xf32>
    tpu.vector_store %arg8[%c0_75, %c768_76], %122 {strides = array<i32>} : memref<1x1280xf32, #tpu.memory_space<vmem>>, vector<1x256xf32>,
    %c0_77 = arith.constant 0 : index
    %c1024 = arith.constant 1024 : index
    %124 = vector.load %arg5[%c0_77, %c1024] : memref<32x1280xbf16, #tpu.memory_space<vmem>>, vector<32x256xbf16>
    %cst_78 = arith.constant dense<0.000000e+00> : vector<64x256xf32>
    %125 = tpu.matmul %55, %124, %cst_78 {dimension_numbers = #tpu.dot_dimension_numbers<[1], [0], [0], [1], [0, 0, 1, 1], [], []>} : vector<64x32xbf16>, vector<32x256xbf16>, vector<64x256xf32> -> vector<64x256xf32>
    %c0_79 = arith.constant 0 : index
    %c1024_80 = arith.constant 1024 : index
    %126 = vector.load %arg6[%c0_79, %c1024_80] : memref<1x1280xf32, #tpu.memory_space<vmem>>, vector<1x256xf32>
    %127 = vector.broadcast %126 : vector<1x256xf32> to vector<64x256xf32>
    %128 = arith.addf %125, %127 : vector<64x256xf32>
    %cst_81 = arith.constant 0.000000e+00 : f32
    %129 = vector.broadcast %cst_81 : f32 to vector<64x256xf32>
    %130 = arith.subf %129, %128 : vector<64x256xf32>
    %131 = math.exp %130 : vector<64x256xf32>
    %cst_82 = arith.constant 1.000000e+00 : f32
    %132 = vector.broadcast %cst_82 : f32 to vector<64x256xf32>
    %133 = arith.addf %132, %131 : vector<64x256xf32>
    %134 = tpu.reciprocal %133 {approx = true} : vector<64x256xf32> -> vector<64x256xf32>
    %135 = arith.mulf %128, %134 : vector<64x256xf32>
    %c0_83 = arith.constant 0 : index
    %c1024_84 = arith.constant 1024 : index
    %136 = vector.load %arg8[%c0_83, %c1024_84] : memref<1x1280xf32, #tpu.memory_space<vmem>>, vector<1x256xf32>
    %cst_85 = arith.constant dense<0.000000e+00> : vector<256xf32>
    %137 = vector.multi_reduction <add>, %135, %cst_85 [0] : vector<64x256xf32> to vector<256xf32>
    %138 = vector.shape_cast %137 : vector<256xf32> to vector<1x256xf32>
    %139 = arith.addf %136, %138 : vector<1x256xf32>
    %c0_86 = arith.constant 0 : index
    %c1024_87 = arith.constant 1024 : index
    %140 = vector.load %arg8[%c0_86, %c1024_87] : memref<1x1280xf32, #tpu.memory_space<vmem>>, vector<1x256xf32>
    tpu.vector_store %arg8[%c0_86, %c1024_87], %139 {strides = array<i32>} : memref<1x1280xf32, #tpu.memory_space<vmem>>, vector<1x256xf32>,
    %c0_i32_88 = arith.constant 0 : i32
    %141 = arith.cmpi eq, %arg1, %c0_i32_88 : i32
    %142 = arith.extui %141 : i1 to i32
    %c0_i32_89 = arith.constant 0 : i32
    %143 = arith.cmpi ne, %142, %c0_i32_89 : i32
    scf.if %143 {
      %c0_90 = arith.constant 0 : index
      %c0_91 = arith.constant 0 : index
      %144 = vector.load %arg8[%c0_90, %c0_91] : memref<1x1280xf32, #tpu.memory_space<vmem>>, vector<1x1280xf32>
      %cst_92 = arith.constant 1.562500e-02 : f32
      %145 = vector.broadcast %cst_92 : f32 to vector<1x1280xf32>
      %146 = arith.mulf %144, %145 : vector<1x1280xf32>
      %147 = vector.shape_cast %146 : vector<1x1280xf32> to vector<1x1x1280xf32>
      %c0_93 = arith.constant 0 : index
      %c0_94 = arith.constant 0 : index
      %c0_95 = arith.constant 0 : index
      %148 = vector.load %arg7[%c0_93, %c0_94, %c0_95] : memref<1x1x1280xf32, #tpu.memory_space<vmem>>, vector<1x1x1280xf32>
      tpu.vector_store %arg7[%c0_93, %c0_94, %c0_95], %147 {strides = array<i32>} : memref<1x1x1280xf32, #tpu.memory_space<vmem>>, vector<1x1x1280xf32>,
    } else {
    }
    return
  }
  func.func @transform_0(%arg0: i32, %arg1: i32) -> (i32, i32, i32, i32) {
    %c0_i32 = arith.constant 0 : i32
    %c0_i32_0 = arith.constant 0 : i32
    %c0_i32_1 = arith.constant 0 : i32
    %c0_i32_2 = arith.constant 0 : i32
    return %arg0, %c0_i32, %c0_i32_0, %c0_i32_1 : i32, i32, i32, i32
  }
  func.func @transform_1(%arg0: i32, %arg1: i32) -> (i32, i32, i32) {
    %c0_i32 = arith.constant 0 : i32
    %c0_i32_0 = arith.constant 0 : i32
    %c0_i32_1 = arith.constant 0 : i32
    %c0_i32_2 = arith.constant 0 : i32
    return %c0_i32, %c0_i32_0, %c0_i32_1 : i32, i32, i32
  }
  func.func @transform_2(%arg0: i32, %arg1: i32) -> (i32, i32) {
    %c0_i32 = arith.constant 0 : i32
    %c0_i32_0 = arith.constant 0 : i32
    %c0_i32_1 = arith.constant 0 : i32
    return %c0_i32, %c0_i32_0 : i32, i32
  }
  func.func @transform_3(%arg0: i32, %arg1: i32) -> (i32, i32) {
    %c0_i32 = arith.constant 0 : i32
    %c0_i32_0 = arith.constant 0 : i32
    %c0_i32_1 = arith.constant 0 : i32
    return %c0_i32, %c0_i32_0 : i32, i32
  }
  func.func @transform_4(%arg0: i32, %arg1: i32) -> (i32, i32) {
    %c0_i32 = arith.constant 0 : i32
    %c0_i32_0 = arith.constant 0 : i32
    %c0_i32_1 = arith.constant 0 : i32
    return %c0_i32, %c0_i32_0 : i32, i32
  }
  func.func @transform_5(%arg0: i32, %arg1: i32) -> (i32, i32, i32) {
    %c0_i32 = arith.constant 0 : i32
    %c0_i32_0 = arith.constant 0 : i32
    %c0_i32_1 = arith.constant 0 : i32
    return %arg0, %c0_i32, %c0_i32_0 : i32, i32, i32
  }
}

</mosaic_0001>

<llo_original>
// kernel: efficient_network_forward.1
$region0: #{efficient_network_forward.1}
  #allocation0 [shape = 'u32[]', space=smem, size = 0x4, offset = 0x4, fixed_abs, tag = 'smem constant byte address 0x4 - core index']
  #allocation1 [shape = 'u32[72,128]{1,0:T(1,128)}', space=vmem, size = 0x9000, scoped, tag = 'internal scratch']
  #allocation2 [shape = 'f32[1,1280]{1,0:T(1,128)}', space=vmem, size = 0x1400, scoped, tag = 'scratch operand']
  %s0 = inlined_call_operand.vmem [shape: f32[2,9,9,16], index: 0, kind: input, shape index: {}]
  %s1 = inlined_call_operand.vmem [shape: bf16[4,16,32], index: 1, kind: input, shape index: {}]
  %s2 = inlined_call_operand.vmem [shape: f32[1,32], index: 2, kind: input, shape index: {}]
  %s3 = inlined_call_operand.vmem [shape: bf16[32,1280], index: 3, kind: input, shape index: {}]
  %s4 = inlined_call_operand.vmem [shape: f32[1,1280], index: 4, kind: input, shape index: {}]
  %s5 = inlined_call_operand.vmem [shape: f32[2,1,1280], index: 5, kind: output, shape index: {}]
  %s6 = sld [smem:[#allocation0]]
  $region61: #{efficient_network_forward.1} parent=0
    _
  %s8 = ssub.s32 1, %s6
  %s9 = scalar_select 0, %s8, %s6
  loop: start=0, step=1, limit=4
  $region2: #{efficient_network_forward.1} parent=0 // loop_pre_header
    _
  $region3: #{efficient_network_forward.1} parent=0 // loop_header
    %s11 = sphi 0, %s15
    %p12 = scmp.ge.s32.totalorder %s11, 4
    %s18 = sphi 0, %s30
    %s19 = sphi 0, %s26
    %s20 = sphi 0, %s18
    %s21 = sphi 0, %s19
    %s22 = sphi 0, %s20
    %s23 = sphi 0, %s21
    %s33 = sphi 0, %s35
    %s36 = sphi 0, %s33
    %s37 = sphi 0, %s36
    %s53 = sphi 0, %s37
    %s57 = sphi 0, %s57
    %s59 = sphi 0, %s57
    %s60 = sphi 0, %s59
    %s74 = sphi 0, %s60
    %s78 = sphi 0, %s78
    %s80 = sphi 0, %s78
    %s81 = sphi 0, %s80
    %s95 = sphi 0, %s81
    %s99 = sphi 0, %s99
    %s101 = sphi 0, %s99
    %s102 = sphi 0, %s101
    %s116 = sphi 0, %s102
    %s120 = sphi 0, %s120
    %s122 = sphi 0, %s120
    %s123 = sphi 0, %s122
    %s137 = sphi 0, %s123
    %s143 = sphi 0, %s145
    %s146 = sphi 0, %s143
    %s147 = sphi 0, %s146
    %s163 = sphi 0, %s147
  $region4: #{efficient_network_forward.1} parent=0 // loop_header_branch
    %14 = sbr.rel (%p12) target = $region8
  $region5: #{efficient_network_forward.1} parent=0 // loop_body
    %s16 = ssub.s32 %s11, 1
    %s17 = ssub.s32 %s11, 2
    %s24 = sadd.s32 1, %s19
    %p25 = scmp.ge.s32.totalorder %s24, 1
    %s26 = scalar_select %p25, 0, %s24
    %s27 = sadd.s32 1, %s18
    %s28 = scalar_select %p25, %s27, %s18
    %p29 = scmp.ge.s32.totalorder %s28, 2
    %s30 = scalar_select %p29, 0, %s28
    %s31 = ssub.s32 %s18, %s30
    %p32 = scmp.eq.s32.totalorder %s31, 0
    %s34 = sadd.s32 %s33, 1
    %s35 = scalar_select %p32, %s33, %s34
    %p38 = pneg %p32
    %p39 = scmp.eq.s32.totalorder %s11, 1
    %p40 = por %p38, %p39
    %p41 = scmp.ne.s32.totalorder %s33, %s36
    %p42 = scmp.eq.s32.totalorder %s11, 0
    %p43 = por %p41, %p42
    %p44 = scmp.ne.s32.totalorder %s33, %s36
    %p45 = scmp.eq.s32.totalorder %s16, 1
    %p46 = por %p44, %p45
    %p47 = scmp.ne.s32.totalorder %s36, %s37
    %p48 = scmp.eq.s32.totalorder %s16, 0
    %p49 = por %p47, %p48
    %p50 = scmp.ne.s32.totalorder %s36, %s37
    %p51 = scmp.eq.s32.totalorder %s17, 1
    %p52 = por %p50, %p51
    %p54 = scmp.ne.s32.totalorder %s37, %s53
    %p55 = scmp.eq.s32.totalorder %s17, 0
    %p56 = por %p54, %p55
    %s58 = sadd.s32 %s57, 1
    %p61 = scmp.eq.s32.totalorder %s11, 1
    %p62 = scmp.ne.s32.totalorder %s57, %s59
    %p63 = scmp.eq.s32.totalorder %s11, 0
    %p64 = por %p62, %p63
    %p65 = scmp.ne.s32.totalorder %s57, %s59
    %p66 = scmp.eq.s32.totalorder %s16, 1
    %p67 = por %p65, %p66
    %p68 = scmp.ne.s32.totalorder %s59, %s60
    %p69 = scmp.eq.s32.totalorder %s16, 0
    %p70 = por %p68, %p69
    %p71 = scmp.ne.s32.totalorder %s59, %s60
    %p72 = scmp.eq.s32.totalorder %s17, 1
    %p73 = por %p71, %p72
    %p75 = scmp.ne.s32.totalorder %s60, %s74
    %p76 = scmp.eq.s32.totalorder %s17, 0
    %p77 = por %p75, %p76
    %s79 = sadd.s32 %s78, 1
    %p82 = scmp.eq.s32.totalorder %s11, 1
    %p83 = scmp.ne.s32.totalorder %s78, %s80
    %p84 = scmp.eq.s32.totalorder %s11, 0
    %p85 = por %p83, %p84
    %p86 = scmp.ne.s32.totalorder %s78, %s80
    %p87 = scmp.eq.s32.totalorder %s16, 1
    %p88 = por %p86, %p87
    %p89 = scmp.ne.s32.totalorder %s80, %s81
    %p90 = scmp.eq.s32.totalorder %s16, 0
    %p91 = por %p89, %p90
    %p92 = scmp.ne.s32.totalorder %s80, %s81
    %p93 = scmp.eq.s32.totalorder %s17, 1
    %p94 = por %p92, %p93
    %p96 = scmp.ne.s32.totalorder %s81, %s95
    %p97 = scmp.eq.s32.totalorder %s17, 0
    %p98 = por %p96, %p97
    %s100 = sadd.s32 %s99, 1
    %p103 = scmp.eq.s32.totalorder %s11, 1
    %p104 = scmp.ne.s32.totalorder %s99, %s101
    %p105 = scmp.eq.s32.totalorder %s11, 0
    %p106 = por %p104, %p105
    %p107 = scmp.ne.s32.totalorder %s99, %s101
    %p108 = scmp.eq.s32.totalorder %s16, 1
    %p109 = por %p107, %p108
    %p110 = scmp.ne.s32.totalorder %s101, %s102
    %p111 = scmp.eq.s32.totalorder %s16, 0
    %p112 = por %p110, %p111
    %p113 = scmp.ne.s32.totalorder %s101, %s102
    %p114 = scmp.eq.s32.totalorder %s17, 1
    %p115 = por %p113, %p114
    %p117 = scmp.ne.s32.totalorder %s102, %s116
    %p118 = scmp.eq.s32.totalorder %s17, 0
    %p119 = por %p117, %p118
    %s121 = sadd.s32 %s120, 1
    %p124 = scmp.eq.s32.totalorder %s11, 1
    %p125 = scmp.ne.s32.totalorder %s120, %s122
    %p126 = scmp.eq.s32.totalorder %s11, 0
    %p127 = por %p125, %p126
    %p128 = scmp.ne.s32.totalorder %s120, %s122
    %p129 = scmp.eq.s32.totalorder %s16, 1
    %p130 = por %p128, %p129
    %p131 = scmp.ne.s32.totalorder %s122, %s123
    %p132 = scmp.eq.s32.totalorder %s16, 0
    %p133 = por %p131, %p132
    %p134 = scmp.ne.s32.totalorder %s122, %s123
    %p135 = scmp.eq.s32.totalorder %s17, 1
    %p136 = por %p134, %p135
    %p138 = scmp.ne.s32.totalorder %s123, %s137
    %p139 = scmp.eq.s32.totalorder %s17, 0
    %p140 = por %p138, %p139
    %s141 = ssub.s32 %s18, %s30
    %p142 = scmp.eq.s32.totalorder %s141, 0
    %s144 = sadd.s32 %s143, 1
    %s145 = scalar_select %p142, %s143, %s144
    %p148 = pneg %p142
    %p149 = scmp.eq.s32.totalorder %s11, 1
    %p150 = por %p148, %p149
    %p151 = scmp.ne.s32.totalorder %s143, %s146
    %p152 = scmp.eq.s32.totalorder %s11, 0
    %p153 = por %p151, %p152
    %p154 = scmp.ne.s32.totalorder %s143, %s146
    %p155 = scmp.eq.s32.totalorder %s16, 1
    %p156 = por %p154, %p155
    %p157 = scmp.ne.s32.totalorder %s146, %s147
    %p158 = scmp.eq.s32.totalorder %s16, 0
    %p159 = por %p157, %p158
    %p160 = scmp.ne.s32.totalorder %s146, %s147
    %p161 = scmp.eq.s32.totalorder %s17, 1
    %p162 = por %p160, %p161
    %p164 = scmp.ne.s32.totalorder %s147, %s163
    %p165 = scmp.eq.s32.totalorder %s17, 0
    %p166 = por %p164, %p165
    %p167 = scmp.le.s32.totalorder 1, %s11
    %p168 = scmp.lt.s32.totalorder %s11, 3
    %p169 = pnand %p167, %p168
    %p170 = pneg %p169
    // Predicated region
    $region9: #{efficient_network_forward.1} parent=5 // pred_check
      _
    $region10: #{efficient_network_forward.1} parent=5 // pred_check_branch
      %172 = sbr.rel (%p169) target = $region12
    $region11: #{efficient_network_forward.1} parent=5 // pred_region
      %s173 = ssub.s32 %s11, 1
      // Predicated region
      $region13: #{efficient_network_forward.1} parent=11 // pred_check
        %p174 = pneg %p70
      $region14: #{efficient_network_forward.1} parent=11 // pred_check_branch
        %176 = sbr.rel (%p174) target = $region16
      $region15: #{efficient_network_forward.1} parent=11 // pred_region
        _
      $region16: #{efficient_network_forward.1} parent=11 // pred_fallthru
        _
      // Predicated region
      $region17: #{efficient_network_forward.1} parent=11 // pred_check
        %p177 = pneg %p91
      $region18: #{efficient_network_forward.1} parent=11 // pred_check_branch
        %179 = sbr.rel (%p177) target = $region20
      $region19: #{efficient_network_forward.1} parent=11 // pred_region
        _
      $region20: #{efficient_network_forward.1} parent=11 // pred_fallthru
        _
      // Predicated region
      $region21: #{efficient_network_forward.1} parent=11 // pred_check
        %p180 = pneg %p112
      $region22: #{efficient_network_forward.1} parent=11 // pred_check_branch
        %182 = sbr.rel (%p180) target = $region24
      $region23: #{efficient_network_forward.1} parent=11 // pred_region
        _
      $region24: #{efficient_network_forward.1} parent=11 // pred_fallthru
        _
      // Predicated region
      $region25: #{efficient_network_forward.1} parent=11 // pred_check
        %p183 = pneg %p133
      $region26: #{efficient_network_forward.1} parent=11 // pred_check_branch
        %185 = sbr.rel (%p183) target = $region28
      $region27: #{efficient_network_forward.1} parent=11 // pred_region
        _
      $region28: #{efficient_network_forward.1} parent=11 // pred_fallthru
        _
    $region12: #{efficient_network_forward.1} parent=5 // pred_fallthru
      _
    %p186 = scmp.lt.s32.totalorder %s11, 2
    // Predicated region
    $region29: #{efficient_network_forward.1} parent=5 // pred_check
      %p187 = pneg %p186
    $region30: #{efficient_network_forward.1} parent=5 // pred_check_branch
      %189 = sbr.rel (%p187) target = $region32
    $region31: #{efficient_network_forward.1} parent=5 // pred_region
      // Predicated region
      $region33: #{efficient_network_forward.1} parent=31 // pred_check
        %p190 = pneg %p43
      $region34: #{efficient_network_forward.1} parent=31 // pred_check_branch
        %192 = sbr.rel (%p190) target = $region36
      $region35: #{efficient_network_forward.1} parent=31 // pred_region
        %p193 = scmp.lt.s32.totalorder %s18, 1
        %s194 = scalar_select %p193, %s18, 1
        %s195 = smul.addr %s194, 18
        %s196 = smul.addr %s195, 8
        %s197 = scalar_lea.vmem %s0, %s196
      $region36: #{efficient_network_forward.1} parent=31 // pred_fallthru
        _
    $region32: #{efficient_network_forward.1} parent=5 // pred_fallthru
      _
    %p198 = scmp.le.s32.totalorder 1, %s11
    %p199 = scmp.lt.s32.totalorder %s11, 3
    %p200 = pnand %p198, %p199
    %p201 = pneg %p200
    // Predicated region
    $region37: #{efficient_network_forward.1} parent=5 // pred_check
      _
    $region38: #{efficient_network_forward.1} parent=5 // pred_check_branch
      %203 = sbr.rel (%p200) target = $region40
    $region39: #{efficient_network_forward.1} parent=5 // pred_region
      %s204 = ssub.s32 %s11, 1
      %p205 = scmp.lt.s32.totalorder %s20, 1
      %s206 = scalar_select %p205, %s20, 1
      %s207 = smul.addr %s206, 18
      %s208 = smul.addr %s207, 8
      %s209 = scalar_lea.vmem %s0, %s208
      %p210 = pneg %p49
      %p211 = pneg %p46
      %p212 = pneg %p70
      %p213 = pneg %p67
      %p214 = pneg %p91
      %p215 = pneg %p88
      %p216 = pneg %p112
      %p217 = pneg %p109
      %p218 = pneg %p133
      %p219 = pneg %p130
      %p220 = pneg %p159
      %p221 = pneg %p156
      %p222 = scmp.lt.s32.totalorder %s20, 1
      %s223 = scalar_select %p222, %s20, 1
      %s224 = smul.addr %s223, 10
      %s225 = scalar_lea.vmem %s5, %s224
      %p226 = scmp.lt.s32.totalorder %s20, 1
      %s227 = scalar_select %p226, %s20, 1
      %s228 = smul.addr %s227, 18
      %s229 = smul.addr %s228, 8
      %s230 = scalar_lea.vmem %s0, %s229
      %p231 = scmp.lt.s32.totalorder %s20, 1
      %s232 = scalar_select %p231, %s20, 1
      %s233 = smul.addr %s232, 10
      %s234 = scalar_lea.vmem %s5, %s233
      %p236 = scmp.eq.s32.totalorder %s21, 0
      // Predicated region
      $region41: #{efficient_network_forward.1} parent=39 // pred_check
        %p237 = pneg %p236
      $region42: #{efficient_network_forward.1} parent=39 // pred_check_branch
        %239 = sbr.rel (%p237) target = $region44
      $region43: #{efficient_network_forward.1} parent=39 // pred_region
        %240 = vst [vmem:[#allocation2] sm:$0xff] 0.0
        %v241 = vlaneseq
        %vm242 = vcmp.ge.s32.totalorder %v241, 0
        %vm243 = vcmp.lt.s32.totalorder %v241, 256
        %vm244 = vmand %vm242, %vm243
        %245 = vst.msk [vmem:[#allocation2 + $0x8] sm:$0x3] %vm244, 0.0
      $region44: #{efficient_network_forward.1} parent=39 // pred_fallthru
        _
      %s246 = smul.u32 %s21, 8
      %s247 = smul.u32 %s246, 16
      %s248 = scalar_lea.vmem %s230, %s247
      %v249 = vld [vmem:[%s248] sm:$0xff]
      %v250 = vld [vmem:[%s248 + $0x10] sm:$0xff]
      %v251 = vld [vmem:[%s248 + $0x20] sm:$0xff]
      %v252 = vld [vmem:[%s248 + $0x30] sm:$0xff]
      %v253 = vld [vmem:[%s248 + $0x40] sm:$0xff]
      %v254 = vld [vmem:[%s248 + $0x50] sm:$0xff]
      %v255 = vld [vmem:[%s248 + $0x60] sm:$0xff]
      %v256 = vld [vmem:[%s248 + $0x70] sm:$0xff]
      %v257 = vpack.c.bf16 %v250, %v249
      %v258 = vpack.c.bf16 %v252, %v251
      %v259 = vpack.c.bf16 %v254, %v253
      %v260 = vpack.c.bf16 %v256, %v255
      %v261 = vld [vmem:[%s1] sm:$0xf]
      %v262 = vld [vmem:[%s1 + $0x4] sm:$0xf]
      %v263 = vld [vmem:[%s248 + $0x1] sm:$0xff]
      %v264 = vld [vmem:[%s248 + $0x11] sm:$0xff]
      %v265 = vld [vmem:[%s248 + $0x21] sm:$0xff]
      %v266 = vld [vmem:[%s248 + $0x31] sm:$0xff]
      %v267 = vld [vmem:[%s248 + $0x41] sm:$0xff]
      %v268 = vld [vmem:[%s248 + $0x51] sm:$0xff]
      %v269 = vld [vmem:[%s248 + $0x61] sm:$0xff]
      %v270 = vld [vmem:[%s248 + $0x71] sm:$0xff]
      %v271 = vpack.c.bf16 %v264, %v263
      %v272 = vpack.c.bf16 %v266, %v265
      %v273 = vpack.c.bf16 %v268, %v267
      %v274 = vpack.c.bf16 %v270, %v269
      %s275 = scalar_lea.vmem %s1, 8
      %v276 = vld [vmem:[%s275] sm:$0xf]
      %v277 = vld [vmem:[%s275 + $0x4] sm:$0xf]
      %v280 = vunpack.c.l.b16 %v276
      %v281 = vunpack.c.l.b16 %v277
      %v282 = vpack.c.b16 %v281, %v280
      %vm284 = vcmask 130048
      %v286 = vsel %vm284, %v271, 0
      %v289 = vsel %vm284, %v272, 0
      %v292 = vsel %vm284, %v273, 0
      %v295 = vsel %vm284, %v274, 0
      %297 = vmatpush.bf16.msra.mxu0 0
      %298 = vmatpush.bf16.msra.mxu0 0
      %299 = vmatpush.bf16.msra.mxu0 0
      %300 = vmatpush.bf16.msra.mxu0 0
      %301 = vmatpush.bf16.msra.mxu0 0
      %302 = vmatpush.bf16.msra.mxu0 0
      %303 = vmatpush.bf16.msra.mxu0 0
      %304 = vmatpush.bf16.msra.mxu0 %v282
      %305 = vmatmul.bf16.gmra.mxu0 %v286
      %v306 = vpop.f32.mrf.mxu0
      %v307 = vadd.f32 0.0, %v306
      %v308 = vpop.f32.mrf.mxu0
      %v309 = vadd.f32 0.0, %v308
      %310 = vmatmul.bf16.gmra.mxu0 %v289
      %v311 = vpop.f32.mrf.mxu0
      %v312 = vadd.f32 0.0, %v311
      %v313 = vpop.f32.mrf.mxu0
      %v314 = vadd.f32 0.0, %v313
      %315 = vmatmul.bf16.gmra.mxu0 %v292
      %v316 = vpop.f32.mrf.mxu0
      %v317 = vadd.f32 0.0, %v316
      %v318 = vpop.f32.mrf.mxu0
      %v319 = vadd.f32 0.0, %v318
      %320 = vmatmul.bf16.gmra.mxu0 %v295
      %v321 = vpop.f32.mrf.mxu0
      %v322 = vadd.f32 0.0, %v321
      %v323 = vpop.f32.mrf.mxu0
      %v324 = vadd.f32 0.0, %v323
      %325 = vdwg.mxu0
      %v328 = vunpack.c.l.b16 %v261
      %v329 = vunpack.c.l.b16 %v262
      %v330 = vpack.c.b16 %v329, %v328
      %v333 = vsel %vm284, %v257, 0
      %v336 = vsel %vm284, %v258, 0
      %v339 = vsel %vm284, %v259, 0
      %v342 = vsel %vm284, %v260, 0
      %344 = vmatpush.bf16.msra.mxu0 0
      %345 = vmatpush.bf16.msra.mxu0 0
      %346 = vmatpush.bf16.msra.mxu0 0
      %347 = vmatpush.bf16.msra.mxu0 0
      %348 = vmatpush.bf16.msra.mxu0 0
      %349 = vmatpush.bf16.msra.mxu0 0
      %350 = vmatpush.bf16.msra.mxu0 0
      %351 = vmatpush.bf16.msra.mxu0 %v330
      %352 = vmatmul.bf16.gmra.mxu0 %v333
      %v353 = vpop.f32.mrf.mxu0
      %v354 = vadd.f32 %v307, %v353
      %v355 = vpop.f32.mrf.mxu0
      %v356 = vadd.f32 %v309, %v355
      %357 = vmatmul.bf16.gmra.mxu0 %v336
      %v358 = vpop.f32.mrf.mxu0
      %v359 = vadd.f32 %v312, %v358
      %v360 = vpop.f32.mrf.mxu0
      %v361 = vadd.f32 %v314, %v360
      %362 = vmatmul.bf16.gmra.mxu0 %v339
      %v363 = vpop.f32.mrf.mxu0
      %v364 = vadd.f32 %v317, %v363
      %v365 = vpop.f32.mrf.mxu0
      %v366 = vadd.f32 %v319, %v365
      %367 = vmatmul.bf16.gmra.mxu0 %v342
      %v368 = vpop.f32.mrf.mxu0
      %v369 = vadd.f32 %v322, %v368
      %v370 = vpop.f32.mrf.mxu0
      %v371 = vadd.f32 %v324, %v370
      %372 = vdwg.mxu0
      %s373 = sadd.s32 %s246, 1
      %s374 = smul.u32 %s373, 16
      %s375 = scalar_lea.vmem %s230, %s374
      %v376 = vld [vmem:[%s375] sm:$0xff]
      %v377 = vld [vmem:[%s375 + $0x10] sm:$0xff]
      %v378 = vld [vmem:[%s375 + $0x20] sm:$0xff]
      %v379 = vld [vmem:[%s375 + $0x30] sm:$0xff]
      %v380 = vld [vmem:[%s375 + $0x40] sm:$0xff]
      %v381 = vld [vmem:[%s375 + $0x50] sm:$0xff]
      %v382 = vld [vmem:[%s375 + $0x60] sm:$0xff]
      %v383 = vld [vmem:[%s375 + $0x70] sm:$0xff]
      %v384 = vpack.c.bf16 %v377, %v376
      %v385 = vpack.c.bf16 %v379, %v378
      %v386 = vpack.c.bf16 %v381, %v380
      %v387 = vpack.c.bf16 %v383, %v382
      %s388 = scalar_lea.vmem %s1, 16
      %v389 = vld [vmem:[%s388] sm:$0xf]
      %v390 = vld [vmem:[%s388 + $0x4] sm:$0xf]
      %v393 = vunpack.c.l.b16 %v389
      %v394 = vunpack.c.l.b16 %v390
      %v395 = vpack.c.b16 %v394, %v393
      %v398 = vsel %vm284, %v384, 0
      %v401 = vsel %vm284, %v385, 0
      %v404 = vsel %vm284, %v386, 0
      %v407 = vsel %vm284, %v387, 0
      %409 = vmatpush.bf16.msra.mxu0 0
      %410 = vmatpush.bf16.msra.mxu0 0
      %411 = vmatpush.bf16.msra.mxu0 0
      %412 = vmatpush.bf16.msra.mxu0 0
      %413 = vmatpush.bf16.msra.mxu0 0
      %414 = vmatpush.bf16.msra.mxu0 0
      %415 = vmatpush.bf16.msra.mxu0 0
      %416 = vmatpush.bf16.msra.mxu0 %v395
      %417 = vmatmul.bf16.gmra.mxu0 %v398
      %v418 = vpop.f32.mrf.mxu0
      %v419 = vadd.f32 0.0, %v418
      %v420 = vpop.f32.mrf.mxu0
      %v421 = vadd.f32 0.0, %v420
      %422 = vmatmul.bf16.gmra.mxu0 %v401
      %v423 = vpop.f32.mrf.mxu0
      %v424 = vadd.f32 0.0, %v423
      %v425 = vpop.f32.mrf.mxu0
      %v426 = vadd.f32 0.0, %v425
      %427 = vmatmul.bf16.gmra.mxu0 %v404
      %v428 = vpop.f32.mrf.mxu0
      %v429 = vadd.f32 0.0, %v428
      %v430 = vpop.f32.mrf.mxu0
      %v431 = vadd.f32 0.0, %v430
      %432 = vmatmul.bf16.gmra.mxu0 %v407
      %v433 = vpop.f32.mrf.mxu0
      %v434 = vadd.f32 0.0, %v433
      %v435 = vpop.f32.mrf.mxu0
      %v436 = vadd.f32 0.0, %v435
      %437 = vdwg.mxu0
      %v438 = vadd.f32 %v354, %v419
      %v439 = vadd.f32 %v356, %v421
      %v440 = vadd.f32 %v359, %v424
      %v441 = vadd.f32 %v361, %v426
      %v442 = vadd.f32 %v364, %v429
      %v443 = vadd.f32 %v366, %v431
      %v444 = vadd.f32 %v369, %v434
      %v445 = vadd.f32 %v371, %v436
      %v446 = vld [vmem:[%s375 + $0x1] sm:$0xff]
      %v447 = vld [vmem:[%s375 + $0x11] sm:$0xff]
      %v448 = vld [vmem:[%s375 + $0x21] sm:$0xff]
      %v449 = vld [vmem:[%s375 + $0x31] sm:$0xff]
      %v450 = vld [vmem:[%s375 + $0x41] sm:$0xff]
      %v451 = vld [vmem:[%s375 + $0x51] sm:$0xff]
      %v452 = vld [vmem:[%s375 + $0x61] sm:$0xff]
      %v453 = vld [vmem:[%s375 + $0x71] sm:$0xff]
      %v454 = vpack.c.bf16 %v447, %v446
      %v455 = vpack.c.bf16 %v449, %v448
      %v456 = vpack.c.bf16 %v451, %v450
      %v457 = vpack.c.bf16 %v453, %v452
      %s458 = scalar_lea.vmem %s1, 24
      %v459 = vld [vmem:[%s458] sm:$0xf]
      %v460 = vld [vmem:[%s458 + $0x4] sm:$0xf]
      %v463 = vunpack.c.l.b16 %v459
      %v464 = vunpack.c.l.b16 %v460
      %v465 = vpack.c.b16 %v464, %v463
      %v468 = vsel %vm284, %v454, 0
      %v471 = vsel %vm284, %v455, 0
      %v474 = vsel %vm284, %v456, 0
      %v477 = vsel %vm284, %v457, 0
      %479 = vmatpush.bf16.msra.mxu0 0
      %480 = vmatpush.bf16.msra.mxu0 0
      %481 = vmatpush.bf16.msra.mxu0 0
      %482 = vmatpush.bf16.msra.mxu0 0
      %483 = vmatpush.bf16.msra.mxu0 0
      %484 = vmatpush.bf16.msra.mxu0 0
      %485 = vmatpush.bf16.msra.mxu0 0
      %486 = vmatpush.bf16.msra.mxu0 %v465
      %487 = vmatmul.bf16.gmra.mxu0 %v468
      %v488 = vpop.f32.mrf.mxu0
      %v489 = vadd.f32 0.0, %v488
      %v490 = vpop.f32.mrf.mxu0
      %v491 = vadd.f32 0.0, %v490
      %492 = vmatmul.bf16.gmra.mxu0 %v471
      %v493 = vpop.f32.mrf.mxu0
      %v494 = vadd.f32 0.0, %v493
      %v495 = vpop.f32.mrf.mxu0
      %v496 = vadd.f32 0.0, %v495
      %497 = vmatmul.bf16.gmra.mxu0 %v474
      %v498 = vpop.f32.mrf.mxu0
      %v499 = vadd.f32 0.0, %v498
      %v500 = vpop.f32.mrf.mxu0
      %v501 = vadd.f32 0.0, %v500
      %502 = vmatmul.bf16.gmra.mxu0 %v477
      %v503 = vpop.f32.mrf.mxu0
      %v504 = vadd.f32 0.0, %v503
      %v505 = vpop.f32.mrf.mxu0
      %v506 = vadd.f32 0.0, %v505
      %507 = vdwg.mxu0
      %v508 = vadd.f32 %v438, %v489
      %v509 = vadd.f32 %v439, %v491
      %v510 = vadd.f32 %v440, %v494
      %v511 = vadd.f32 %v441, %v496
      %v512 = vadd.f32 %v442, %v499
      %v513 = vadd.f32 %v443, %v501
      %v514 = vadd.f32 %v444, %v504
      %v515 = vadd.f32 %v445, %v506
      %v516 = vld [vmem:[%s2] sm:$0x1]
      %v518 = vperm.slane %v516, 0
      %v520 = vadd.f32 %v508, %v518
      %v521 = vadd.f32 %v509, %v518
      %v522 = vadd.f32 %v510, %v518
      %v523 = vadd.f32 %v511, %v518
      %v524 = vadd.f32 %v512, %v518
      %v525 = vadd.f32 %v513, %v518
      %v526 = vadd.f32 %v514, %v518
      %v527 = vadd.f32 %v515, %v518
      %v528 = vsub.f32 0.0, %v520
      %v529 = vsub.f32 0.0, %v521
      %v530 = vsub.f32 0.0, %v522
      %v531 = vsub.f32 0.0, %v523
      %v532 = vsub.f32 0.0, %v524
      %v533 = vsub.f32 0.0, %v525
      %v534 = vsub.f32 0.0, %v526
      %v535 = vsub.f32 0.0, %v527
      %v536 = vmul.f32 %v528, 1.442695
      %v537 = vpow.pop %v536
      %v538 = vmul.f32 %v529, 1.442695
      %v539 = vpow.pop %v538
      %v540 = vmul.f32 %v530, 1.442695
      %v541 = vpow.pop %v540
      %v542 = vmul.f32 %v531, 1.442695
      %v543 = vpow.pop %v542
      %v544 = vmul.f32 %v532, 1.442695
      %v545 = vpow.pop %v544
      %v546 = vmul.f32 %v533, 1.442695
      %v547 = vpow.pop %v546
      %v548 = vmul.f32 %v534, 1.442695
      %v549 = vpow.pop %v548
      %v550 = vmul.f32 %v535, 1.442695
      %v551 = vpow.pop %v550
      %v552 = vadd.f32 %v537, 1.0
      %v553 = vadd.f32 %v539, 1.0
      %v554 = vadd.f32 %v541, 1.0
      %v555 = vadd.f32 %v543, 1.0
      %v556 = vadd.f32 %v545, 1.0
      %v557 = vadd.f32 %v547, 1.0
      %v558 = vadd.f32 %v549, 1.0
      %v559 = vadd.f32 %v551, 1.0
      %v560 = vrcp.pop %v552
      %v561 = vrcp.pop %v553
      %v562 = vrcp.pop %v554
      %v563 = vrcp.pop %v555
      %v564 = vrcp.pop %v556
      %v565 = vrcp.pop %v557
      %v566 = vrcp.pop %v558
      %v567 = vrcp.pop %v559
      %v568 = vmul.f32 %v520, %v560
      %v569 = vmul.f32 %v521, %v561
      %v570 = vmul.f32 %v522, %v562
      %v571 = vmul.f32 %v523, %v563
      %v572 = vmul.f32 %v524, %v564
      %v573 = vmul.f32 %v525, %v565
      %v574 = vmul.f32 %v526, %v566
      %v575 = vmul.f32 %v527, %v567
      %v576 = vpack.c.bf16 %v569, %v568
      %v577 = vpack.c.bf16 %v571, %v570
      %v578 = vpack.c.bf16 %v573, %v572
      %v579 = vpack.c.bf16 %v575, %v574
      %v580 = vld [vmem:[%s3] sm:$0xff]
      %v581 = vld [vmem:[%s3 + $0x28] sm:$0xff]
      %v582 = vld [vmem:[%s3 + $0x50] sm:$0xff]
      %v583 = vld [vmem:[%s3 + $0x78] sm:$0xff]
      %v584 = vld [vmem:[%s4] sm:$0x3]
      %v586 = vperm.slane %v584, 0
      %v587 = vperm.slane %v584, 1
      %v594 = vunpack.c.l.b16 %v580
      %v595 = vunpack.c.h.b16 %v580
      %v596 = vunpack.c.l.b16 %v581
      %v597 = vunpack.c.h.b16 %v581
      %v598 = vunpack.c.l.b16 %v582
      %v599 = vunpack.c.h.b16 %v582
      %v600 = vunpack.c.l.b16 %v583
      %v601 = vunpack.c.h.b16 %v583
      %v602 = vpack.c.b16 %v596, %v594
      %v603 = vpack.c.b16 %v597, %v595
      %v604 = vpack.c.b16 %v600, %v598
      %v605 = vpack.c.b16 %v601, %v599
      %vm610 = vcmask 261120
      %v612 = vsel %vm610, %v576, 0
      %v615 = vsel %vm610, %v577, 0
      %v618 = vsel %vm610, %v578, 0
      %v621 = vsel %vm610, %v579, 0
      %623 = vmatpush.bf16.msra.mxu0 0
      %624 = vmatpush.bf16.msra.mxu0 0
      %625 = vmatpush.bf16.msra.mxu0 0
      %626 = vmatpush.bf16.msra.mxu0 0
      %627 = vmatpush.bf16.msra.mxu0 0
      %628 = vmatpush.bf16.msra.mxu0 0
      %629 = vmatpush.bf16.msra.mxu0 %v604
      %630 = vmatpush.bf16.msra.mxu0 %v602
      %631 = vmatmul.bf16.gmra.mxu0 %v612
      %v632 = vpop.f32.mrf.mxu0
      %v633 = vadd.f32 %v586, %v632
      %v634 = vpop.f32.mrf.mxu0
      %v635 = vadd.f32 %v586, %v634
      %636 = vmatmul.bf16.gmra.mxu0 %v615
      %v637 = vpop.f32.mrf.mxu0
      %v638 = vadd.f32 %v586, %v637
      %v639 = vpop.f32.mrf.mxu0
      %v640 = vadd.f32 %v586, %v639
      %641 = vmatmul.bf16.gmra.mxu0 %v618
      %v642 = vpop.f32.mrf.mxu0
      %v643 = vadd.f32 %v586, %v642
      %v644 = vpop.f32.mrf.mxu0
      %v645 = vadd.f32 %v586, %v644
      %646 = vmatmul.bf16.gmra.mxu0 %v621
      %v647 = vpop.f32.mrf.mxu0
      %v648 = vadd.f32 %v586, %v647
      %v649 = vpop.f32.mrf.mxu0
      %v650 = vadd.f32 %v586, %v649
      %651 = vdwg.mxu0
      %652 = vmatpush.bf16.msra.mxu0 0
      %653 = vmatpush.bf16.msra.mxu0 0
      %654 = vmatpush.bf16.msra.mxu0 0
      %655 = vmatpush.bf16.msra.mxu0 0
      %656 = vmatpush.bf16.msra.mxu0 0
      %657 = vmatpush.bf16.msra.mxu0 0
      %658 = vmatpush.bf16.msra.mxu0 %v605
      %659 = vmatpush.bf16.msra.mxu0 %v603
      %660 = vmatmul.bf16.gmra.mxu0 %v612
      %v661 = vpop.f32.mrf.mxu0
      %v662 = vadd.f32 %v587, %v661
      %v663 = vpop.f32.mrf.mxu0
      %v664 = vadd.f32 %v587, %v663
      %665 = vmatmul.bf16.gmra.mxu0 %v615
      %v666 = vpop.f32.mrf.mxu0
      %v667 = vadd.f32 %v587, %v666
      %v668 = vpop.f32.mrf.mxu0
      %v669 = vadd.f32 %v587, %v668
      %670 = vmatmul.bf16.gmra.mxu0 %v618
      %v671 = vpop.f32.mrf.mxu0
      %v672 = vadd.f32 %v587, %v671
      %v673 = vpop.f32.mrf.mxu0
      %v674 = vadd.f32 %v587, %v673
      %675 = vmatmul.bf16.gmra.mxu0 %v621
      %v676 = vpop.f32.mrf.mxu0
      %v677 = vadd.f32 %v587, %v676
      %v678 = vpop.f32.mrf.mxu0
      %v679 = vadd.f32 %v587, %v678
      %680 = vdwg.mxu0
      %v681 = vsub.f32 0.0, %v633
      %v682 = vsub.f32 0.0, %v662
      %v683 = vsub.f32 0.0, %v635
      %v684 = vsub.f32 0.0, %v664
      %v685 = vsub.f32 0.0, %v638
      %v686 = vsub.f32 0.0, %v667
      %v687 = vsub.f32 0.0, %v640
      %v688 = vsub.f32 0.0, %v669
      %v689 = vsub.f32 0.0, %v643
      %v690 = vsub.f32 0.0, %v672
      %v691 = vsub.f32 0.0, %v645
      %v692 = vsub.f32 0.0, %v674
      %v693 = vsub.f32 0.0, %v648
      %v694 = vsub.f32 0.0, %v677
      %v695 = vsub.f32 0.0, %v650
      %v696 = vsub.f32 0.0, %v679
      %v697 = vmul.f32 %v681, 1.442695
      %v698 = vpow.pop %v697
      %v699 = vmul.f32 %v682, 1.442695
      %v700 = vpow.pop %v699
      %v701 = vmul.f32 %v683, 1.442695
      %v702 = vpow.pop %v701
      %v703 = vmul.f32 %v684, 1.442695
      %v704 = vpow.pop %v703
      %v705 = vmul.f32 %v685, 1.442695
      %v706 = vpow.pop %v705
      %v707 = vmul.f32 %v686, 1.442695
      %v708 = vpow.pop %v707
      %v709 = vmul.f32 %v687, 1.442695
      %v710 = vpow.pop %v709
      %v711 = vmul.f32 %v688, 1.442695
      %v712 = vpow.pop %v711
      %v713 = vmul.f32 %v689, 1.442695
      %v714 = vpow.pop %v713
      %v715 = vmul.f32 %v690, 1.442695
      %v716 = vpow.pop %v715
      %v717 = vmul.f32 %v691, 1.442695
      %v718 = vpow.pop %v717
      %v719 = vmul.f32 %v692, 1.442695
      %v720 = vpow.pop %v719
      %v721 = vmul.f32 %v693, 1.442695
      %v722 = vpow.pop %v721
      %v723 = vmul.f32 %v694, 1.442695
      %v724 = vpow.pop %v723
      %v725 = vmul.f32 %v695, 1.442695
      %v726 = vpow.pop %v725
      %v727 = vmul.f32 %v696, 1.442695
      %v728 = vpow.pop %v727
      %v729 = vadd.f32 %v698, 1.0
      %v730 = vadd.f32 %v700, 1.0
      %v731 = vadd.f32 %v702, 1.0
      %v732 = vadd.f32 %v704, 1.0
      %v733 = vadd.f32 %v706, 1.0
      %v734 = vadd.f32 %v708, 1.0
      %v735 = vadd.f32 %v710, 1.0
      %v736 = vadd.f32 %v712, 1.0
      %v737 = vadd.f32 %v714, 1.0
      %v738 = vadd.f32 %v716, 1.0
      %v739 = vadd.f32 %v718, 1.0
      %v740 = vadd.f32 %v720, 1.0
      %v741 = vadd.f32 %v722, 1.0
      %v742 = vadd.f32 %v724, 1.0
      %v743 = vadd.f32 %v726, 1.0
      %v744 = vadd.f32 %v728, 1.0
      %v745 = vrcp.pop %v729
      %v746 = vrcp.pop %v730
      %v747 = vrcp.pop %v731
      %v748 = vrcp.pop %v732
      %v749 = vrcp.pop %v733
      %v750 = vrcp.pop %v734
      %v751 = vrcp.pop %v735
      %v752 = vrcp.pop %v736
      %v753 = vrcp.pop %v737
      %v754 = vrcp.pop %v738
      %v755 = vrcp.pop %v739
      %v756 = vrcp.pop %v740
      %v757 = vrcp.pop %v741
      %v758 = vrcp.pop %v742
      %v759 = vrcp.pop %v743
      %v760 = vrcp.pop %v744
      %v761 = vmul.f32 %v633, %v745
      %v762 = vmul.f32 %v662, %v746
      %v763 = vmul.f32 %v635, %v747
      %v764 = vmul.f32 %v664, %v748
      %v765 = vmul.f32 %v638, %v749
      %v766 = vmul.f32 %v667, %v750
      %v767 = vmul.f32 %v640, %v751
      %v768 = vmul.f32 %v669, %v752
      %v769 = vmul.f32 %v643, %v753
      %v770 = vmul.f32 %v672, %v754
      %v771 = vmul.f32 %v645, %v755
      %v772 = vmul.f32 %v674, %v756
      %v773 = vmul.f32 %v648, %v757
      %v774 = vmul.f32 %v677, %v758
      %v775 = vmul.f32 %v650, %v759
      %v776 = vmul.f32 %v679, %v760
      %v777 = vld [vmem:[#allocation2] sm:$0x3]
      %v778 = vadd.f32 %v761, %v763
      %v779 = vadd.f32 %v778, %v765
      %v780 = vadd.f32 %v779, %v767
      %v781 = vadd.f32 %v780, %v769
      %v782 = vadd.f32 %v781, %v771
      %v783 = vadd.f32 %v782, %v773
      %v784 = vadd.f32 %v783, %v775
      %v785 = vrot.slane %v784, 4
      %v786 = vadd.f32 %v784, %v785
      %v787 = vrot.slane %v786, 2
      %v788 = vadd.f32 %v786, %v787
      %v789 = vrot.slane %v788, 1
      %v790 = vadd.f32 %v788, %v789
      %v791 = vadd.f32 %v762, %v764
      %v792 = vadd.f32 %v791, %v766
      %v793 = vadd.f32 %v792, %v768
      %v794 = vadd.f32 %v793, %v770
      %v795 = vadd.f32 %v794, %v772
      %v796 = vadd.f32 %v795, %v774
      %v797 = vadd.f32 %v796, %v776
      %v798 = vrot.slane %v797, 4
      %v799 = vadd.f32 %v797, %v798
      %v800 = vrot.slane %v799, 2
      %v801 = vadd.f32 %v799, %v800
      %v802 = vrot.slane %v801, 1
      %v803 = vadd.f32 %v801, %v802
      %v806 = vrot.slane %v803, 7
      %vm807 = vcmask 1040384
      %v808 = vsel %vm807, %v790, %v806
      %v810 = vadd.f32 %v777, %v808
      %v811 = vlaneseq
      %vm812 = vcmp.ge.s32.totalorder %v811, 0
      %vm813 = vcmp.lt.s32.totalorder %v811, 256
      %vm814 = vmand %vm812, %vm813
      %815 = vst.msk [vmem:[#allocation2] sm:$0x3] %vm814, %v810
      %v816 = vld [vmem:[%s3 + $0x8] sm:$0xff]
      %v817 = vld [vmem:[%s3 + $0x30] sm:$0xff]
      %v818 = vld [vmem:[%s3 + $0x58] sm:$0xff]
      %v819 = vld [vmem:[%s3 + $0x80] sm:$0xff]
      %v820 = vld [vmem:[%s4 + $0x2] sm:$0x3]
      %v822 = vperm.slane %v820, 0
      %v823 = vperm.slane %v820, 1
      %v830 = vunpack.c.l.b16 %v816
      %v831 = vunpack.c.h.b16 %v816
      %v832 = vunpack.c.l.b16 %v817
      %v833 = vunpack.c.h.b16 %v817
      %v834 = vunpack.c.l.b16 %v818
      %v835 = vunpack.c.h.b16 %v818
      %v836 = vunpack.c.l.b16 %v819
      %v837 = vunpack.c.h.b16 %v819
      %v838 = vpack.c.b16 %v832, %v830
      %v839 = vpack.c.b16 %v833, %v831
      %v840 = vpack.c.b16 %v836, %v834
      %v841 = vpack.c.b16 %v837, %v835
      %846 = vmatpush.bf16.msra.mxu0 0
      %847 = vmatpush.bf16.msra.mxu0 0
      %848 = vmatpush.bf16.msra.mxu0 0
      %849 = vmatpush.bf16.msra.mxu0 0
      %850 = vmatpush.bf16.msra.mxu0 0
      %851 = vmatpush.bf16.msra.mxu0 0
      %852 = vmatpush.bf16.msra.mxu0 %v840
      %853 = vmatpush.bf16.msra.mxu0 %v838
      %854 = vmatmul.bf16.gmra.mxu0 %v612
      %v855 = vpop.f32.mrf.mxu0
      %v856 = vadd.f32 %v822, %v855
      %v857 = vpop.f32.mrf.mxu0
      %v858 = vadd.f32 %v822, %v857
      %859 = vmatmul.bf16.gmra.mxu0 %v615
      %v860 = vpop.f32.mrf.mxu0
      %v861 = vadd.f32 %v822, %v860
      %v862 = vpop.f32.mrf.mxu0
      %v863 = vadd.f32 %v822, %v862
      %864 = vmatmul.bf16.gmra.mxu0 %v618
      %v865 = vpop.f32.mrf.mxu0
      %v866 = vadd.f32 %v822, %v865
      %v867 = vpop.f32.mrf.mxu0
      %v868 = vadd.f32 %v822, %v867
      %869 = vmatmul.bf16.gmra.mxu0 %v621
      %v870 = vpop.f32.mrf.mxu0
      %v871 = vadd.f32 %v822, %v870
      %v872 = vpop.f32.mrf.mxu0
      %v873 = vadd.f32 %v822, %v872
      %874 = vdwg.mxu0
      %875 = vmatpush.bf16.msra.mxu0 0
      %876 = vmatpush.bf16.msra.mxu0 0
      %877 = vmatpush.bf16.msra.mxu0 0
      %878 = vmatpush.bf16.msra.mxu0 0
      %879 = vmatpush.bf16.msra.mxu0 0
      %880 = vmatpush.bf16.msra.mxu0 0
      %881 = vmatpush.bf16.msra.mxu0 %v841
      %882 = vmatpush.bf16.msra.mxu0 %v839
      %883 = vmatmul.bf16.gmra.mxu0 %v612
      %v884 = vpop.f32.mrf.mxu0
      %v885 = vadd.f32 %v823, %v884
      %v886 = vpop.f32.mrf.mxu0
      %v887 = vadd.f32 %v823, %v886
      %888 = vmatmul.bf16.gmra.mxu0 %v615
      %v889 = vpop.f32.mrf.mxu0
      %v890 = vadd.f32 %v823, %v889
      %v891 = vpop.f32.mrf.mxu0
      %v892 = vadd.f32 %v823, %v891
      %893 = vmatmul.bf16.gmra.mxu0 %v618
      %v894 = vpop.f32.mrf.mxu0
      %v895 = vadd.f32 %v823, %v894
      %v896 = vpop.f32.mrf.mxu0
      %v897 = vadd.f32 %v823, %v896
      %898 = vmatmul.bf16.gmra.mxu0 %v621
      %v899 = vpop.f32.mrf.mxu0
      %v900 = vadd.f32 %v823, %v899
      %v901 = vpop.f32.mrf.mxu0
      %v902 = vadd.f32 %v823, %v901
      %903 = vdwg.mxu0
      %v904 = vsub.f32 0.0, %v856
      %v905 = vsub.f32 0.0, %v885
      %v906 = vsub.f32 0.0, %v858
      %v907 = vsub.f32 0.0, %v887
      %v908 = vsub.f32 0.0, %v861
      %v909 = vsub.f32 0.0, %v890
      %v910 = vsub.f32 0.0, %v863
      %v911 = vsub.f32 0.0, %v892
      %v912 = vsub.f32 0.0, %v866
      %v913 = vsub.f32 0.0, %v895
      %v914 = vsub.f32 0.0, %v868
      %v915 = vsub.f32 0.0, %v897
      %v916 = vsub.f32 0.0, %v871
      %v917 = vsub.f32 0.0, %v900
      %v918 = vsub.f32 0.0, %v873
      %v919 = vsub.f32 0.0, %v902
      %v920 = vmul.f32 %v904, 1.442695
      %v921 = vpow.pop %v920
      %v922 = vmul.f32 %v905, 1.442695
      %v923 = vpow.pop %v922
      %v924 = vmul.f32 %v906, 1.442695
      %v925 = vpow.pop %v924
      %v926 = vmul.f32 %v907, 1.442695
      %v927 = vpow.pop %v926
      %v928 = vmul.f32 %v908, 1.442695
      %v929 = vpow.pop %v928
      %v930 = vmul.f32 %v909, 1.442695
      %v931 = vpow.pop %v930
      %v932 = vmul.f32 %v910, 1.442695
      %v933 = vpow.pop %v932
      %v934 = vmul.f32 %v911, 1.442695
      %v935 = vpow.pop %v934
      %v936 = vmul.f32 %v912, 1.442695
      %v937 = vpow.pop %v936
      %v938 = vmul.f32 %v913, 1.442695
      %v939 = vpow.pop %v938
      %v940 = vmul.f32 %v914, 1.442695
      %v941 = vpow.pop %v940
      %v942 = vmul.f32 %v915, 1.442695
      %v943 = vpow.pop %v942
      %v944 = vmul.f32 %v916, 1.442695
      %v945 = vpow.pop %v944
      %v946 = vmul.f32 %v917, 1.442695
      %v947 = vpow.pop %v946
      %v948 = vmul.f32 %v918, 1.442695
      %v949 = vpow.pop %v948
      %v950 = vmul.f32 %v919, 1.442695
      %v951 = vpow.pop %v950
      %v952 = vadd.f32 %v921, 1.0
      %v953 = vadd.f32 %v923, 1.0
      %v954 = vadd.f32 %v925, 1.0
      %v955 = vadd.f32 %v927, 1.0
      %v956 = vadd.f32 %v929, 1.0
      %v957 = vadd.f32 %v931, 1.0
      %v958 = vadd.f32 %v933, 1.0
      %v959 = vadd.f32 %v935, 1.0
      %v960 = vadd.f32 %v937, 1.0
      %v961 = vadd.f32 %v939, 1.0
      %v962 = vadd.f32 %v941, 1.0
      %v963 = vadd.f32 %v943, 1.0
      %v964 = vadd.f32 %v945, 1.0
      %v965 = vadd.f32 %v947, 1.0
      %v966 = vadd.f32 %v949, 1.0
      %v967 = vadd.f32 %v951, 1.0
      %v968 = vrcp.pop %v952
      %v969 = vrcp.pop %v953
      %v970 = vrcp.pop %v954
      %v971 = vrcp.pop %v955
      %v972 = vrcp.pop %v956
      %v973 = vrcp.pop %v957
      %v974 = vrcp.pop %v958
      %v975 = vrcp.pop %v959
      %v976 = vrcp.pop %v960
      %v977 = vrcp.pop %v961
      %v978 = vrcp.pop %v962
      %v979 = vrcp.pop %v963
      %v980 = vrcp.pop %v964
      %v981 = vrcp.pop %v965
      %v982 = vrcp.pop %v966
      %v983 = vrcp.pop %v967
      %v984 = vmul.f32 %v856, %v968
      %v985 = vmul.f32 %v885, %v969
      %v986 = vmul.f32 %v858, %v970
      %v987 = vmul.f32 %v887, %v971
      %v988 = vmul.f32 %v861, %v972
      %v989 = vmul.f32 %v890, %v973
      %v990 = vmul.f32 %v863, %v974
      %v991 = vmul.f32 %v892, %v975
      %v992 = vmul.f32 %v866, %v976
      %v993 = vmul.f32 %v895, %v977
      %v994 = vmul.f32 %v868, %v978
      %v995 = vmul.f32 %v897, %v979
      %v996 = vmul.f32 %v871, %v980
      %v997 = vmul.f32 %v900, %v981
      %v998 = vmul.f32 %v873, %v982
      %v999 = vmul.f32 %v902, %v983
      %v1000 = vld [vmem:[#allocation2 + $0x2] sm:$0x3]
      %v1001 = vadd.f32 %v984, %v986
      %v1002 = vadd.f32 %v1001, %v988
      %v1003 = vadd.f32 %v1002, %v990
      %v1004 = vadd.f32 %v1003, %v992
      %v1005 = vadd.f32 %v1004, %v994
      %v1006 = vadd.f32 %v1005, %v996
      %v1007 = vadd.f32 %v1006, %v998
      %v1008 = vrot.slane %v1007, 4
      %v1009 = vadd.f32 %v1007, %v1008
      %v1010 = vrot.slane %v1009, 2
      %v1011 = vadd.f32 %v1009, %v1010
      %v1012 = vrot.slane %v1011, 1
      %v1013 = vadd.f32 %v1011, %v1012
      %v1014 = vadd.f32 %v985, %v987
      %v1015 = vadd.f32 %v1014, %v989
      %v1016 = vadd.f32 %v1015, %v991
      %v1017 = vadd.f32 %v1016, %v993
      %v1018 = vadd.f32 %v1017, %v995
      %v1019 = vadd.f32 %v1018, %v997
      %v1020 = vadd.f32 %v1019, %v999
      %v1021 = vrot.slane %v1020, 4
      %v1022 = vadd.f32 %v1020, %v1021
      %v1023 = vrot.slane %v1022, 2
      %v1024 = vadd.f32 %v1022, %v1023
      %v1025 = vrot.slane %v1024, 1
      %v1026 = vadd.f32 %v1024, %v1025
      %v1029 = vrot.slane %v1026, 7
      %v1030 = vsel %vm807, %v1013, %v1029
      %v1032 = vadd.f32 %v1000, %v1030
      %1033 = vst.msk [vmem:[#allocation2 + $0x2] sm:$0x3] %vm814, %v1032
      %v1034 = vld [vmem:[%s3 + $0x10] sm:$0xff]
      %v1035 = vld [vmem:[%s3 + $0x38] sm:$0xff]
      %v1036 = vld [vmem:[%s3 + $0x60] sm:$0xff]
      %v1037 = vld [vmem:[%s3 + $0x88] sm:$0xff]
      %v1038 = vld [vmem:[%s4 + $0x4] sm:$0x3]
      %v1040 = vperm.slane %v1038, 0
      %v1041 = vperm.slane %v1038, 1
      %v1048 = vunpack.c.l.b16 %v1034
      %v1049 = vunpack.c.h.b16 %v1034
      %v1050 = vunpack.c.l.b16 %v1035
      %v1051 = vunpack.c.h.b16 %v1035
      %v1052 = vunpack.c.l.b16 %v1036
      %v1053 = vunpack.c.h.b16 %v1036
      %v1054 = vunpack.c.l.b16 %v1037
      %v1055 = vunpack.c.h.b16 %v1037
      %v1056 = vpack.c.b16 %v1050, %v1048
      %v1057 = vpack.c.b16 %v1051, %v1049
      %v1058 = vpack.c.b16 %v1054, %v1052
      %v1059 = vpack.c.b16 %v1055, %v1053
      %1064 = vmatpush.bf16.msra.mxu0 0
      %1065 = vmatpush.bf16.msra.mxu0 0
      %1066 = vmatpush.bf16.msra.mxu0 0
      %1067 = vmatpush.bf16.msra.mxu0 0
      %1068 = vmatpush.bf16.msra.mxu0 0
      %1069 = vmatpush.bf16.msra.mxu0 0
      %1070 = vmatpush.bf16.msra.mxu0 %v1058
      %1071 = vmatpush.bf16.msra.mxu0 %v1056
      %1072 = vmatmul.bf16.gmra.mxu0 %v612
      %v1073 = vpop.f32.mrf.mxu0
      %v1074 = vadd.f32 %v1040, %v1073
      %v1075 = vpop.f32.mrf.mxu0
      %v1076 = vadd.f32 %v1040, %v1075
      %1077 = vmatmul.bf16.gmra.mxu0 %v615
      %v1078 = vpop.f32.mrf.mxu0
      %v1079 = vadd.f32 %v1040, %v1078
      %v1080 = vpop.f32.mrf.mxu0
      %v1081 = vadd.f32 %v1040, %v1080
      %1082 = vmatmul.bf16.gmra.mxu0 %v618
      %v1083 = vpop.f32.mrf.mxu0
      %v1084 = vadd.f32 %v1040, %v1083
      %v1085 = vpop.f32.mrf.mxu0
      %v1086 = vadd.f32 %v1040, %v1085
      %1087 = vmatmul.bf16.gmra.mxu0 %v621
      %v1088 = vpop.f32.mrf.mxu0
      %v1089 = vadd.f32 %v1040, %v1088
      %v1090 = vpop.f32.mrf.mxu0
      %v1091 = vadd.f32 %v1040, %v1090
      %1092 = vdwg.mxu0
      %1093 = vmatpush.bf16.msra.mxu0 0
      %1094 = vmatpush.bf16.msra.mxu0 0
      %1095 = vmatpush.bf16.msra.mxu0 0
      %1096 = vmatpush.bf16.msra.mxu0 0
      %1097 = vmatpush.bf16.msra.mxu0 0
      %1098 = vmatpush.bf16.msra.mxu0 0
      %1099 = vmatpush.bf16.msra.mxu0 %v1059
      %1100 = vmatpush.bf16.msra.mxu0 %v1057
      %1101 = vmatmul.bf16.gmra.mxu0 %v612
      %v1102 = vpop.f32.mrf.mxu0
      %v1103 = vadd.f32 %v1041, %v1102
      %v1104 = vpop.f32.mrf.mxu0
      %v1105 = vadd.f32 %v1041, %v1104
      %1106 = vmatmul.bf16.gmra.mxu0 %v615
      %v1107 = vpop.f32.mrf.mxu0
      %v1108 = vadd.f32 %v1041, %v1107
      %v1109 = vpop.f32.mrf.mxu0
      %v1110 = vadd.f32 %v1041, %v1109
      %1111 = vmatmul.bf16.gmra.mxu0 %v618
      %v1112 = vpop.f32.mrf.mxu0
      %v1113 = vadd.f32 %v1041, %v1112
      %v1114 = vpop.f32.mrf.mxu0
      %v1115 = vadd.f32 %v1041, %v1114
      %1116 = vmatmul.bf16.gmra.mxu0 %v621
      %v1117 = vpop.f32.mrf.mxu0
      %v1118 = vadd.f32 %v1041, %v1117
      %v1119 = vpop.f32.mrf.mxu0
      %v1120 = vadd.f32 %v1041, %v1119
      %1121 = vdwg.mxu0
      %v1122 = vsub.f32 0.0, %v1074
      %v1123 = vsub.f32 0.0, %v1103
      %v1124 = vsub.f32 0.0, %v1076
      %v1125 = vsub.f32 0.0, %v1105
      %v1126 = vsub.f32 0.0, %v1079
      %v1127 = vsub.f32 0.0, %v1108
      %v1128 = vsub.f32 0.0, %v1081
      %v1129 = vsub.f32 0.0, %v1110
      %v1130 = vsub.f32 0.0, %v1084
      %v1131 = vsub.f32 0.0, %v1113
      %v1132 = vsub.f32 0.0, %v1086
      %v1133 = vsub.f32 0.0, %v1115
      %v1134 = vsub.f32 0.0, %v1089
      %v1135 = vsub.f32 0.0, %v1118
      %v1136 = vsub.f32 0.0, %v1091
      %v1137 = vsub.f32 0.0, %v1120
      %v1138 = vmul.f32 %v1122, 1.442695
      %v1139 = vpow.pop %v1138
      %v1140 = vmul.f32 %v1123, 1.442695
      %v1141 = vpow.pop %v1140
      %v1142 = vmul.f32 %v1124, 1.442695
      %v1143 = vpow.pop %v1142
      %v1144 = vmul.f32 %v1125, 1.442695
      %v1145 = vpow.pop %v1144
      %v1146 = vmul.f32 %v1126, 1.442695
      %v1147 = vpow.pop %v1146
      %v1148 = vmul.f32 %v1127, 1.442695
      %v1149 = vpow.pop %v1148
      %v1150 = vmul.f32 %v1128, 1.442695
      %v1151 = vpow.pop %v1150
      %v1152 = vmul.f32 %v1129, 1.442695
      %v1153 = vpow.pop %v1152
      %v1154 = vmul.f32 %v1130, 1.442695
      %v1155 = vpow.pop %v1154
      %v1156 = vmul.f32 %v1131, 1.442695
      %v1157 = vpow.pop %v1156
      %v1158 = vmul.f32 %v1132, 1.442695
      %v1159 = vpow.pop %v1158
      %v1160 = vmul.f32 %v1133, 1.442695
      %v1161 = vpow.pop %v1160
      %v1162 = vmul.f32 %v1134, 1.442695
      %v1163 = vpow.pop %v1162
      %v1164 = vmul.f32 %v1135, 1.442695
      %v1165 = vpow.pop %v1164
      %v1166 = vmul.f32 %v1136, 1.442695
      %v1167 = vpow.pop %v1166
      %v1168 = vmul.f32 %v1137, 1.442695
      %v1169 = vpow.pop %v1168
      %v1170 = vadd.f32 %v1139, 1.0
      %v1171 = vadd.f32 %v1141, 1.0
      %v1172 = vadd.f32 %v1143, 1.0
      %v1173 = vadd.f32 %v1145, 1.0
      %v1174 = vadd.f32 %v1147, 1.0
      %v1175 = vadd.f32 %v1149, 1.0
      %v1176 = vadd.f32 %v1151, 1.0
      %v1177 = vadd.f32 %v1153, 1.0
      %v1178 = vadd.f32 %v1155, 1.0
      %v1179 = vadd.f32 %v1157, 1.0
      %v1180 = vadd.f32 %v1159, 1.0
      %v1181 = vadd.f32 %v1161, 1.0
      %v1182 = vadd.f32 %v1163, 1.0
      %v1183 = vadd.f32 %v1165, 1.0
      %v1184 = vadd.f32 %v1167, 1.0
      %v1185 = vadd.f32 %v1169, 1.0
      %v1186 = vrcp.pop %v1170
      %v1187 = vrcp.pop %v1171
      %v1188 = vrcp.pop %v1172
      %v1189 = vrcp.pop %v1173
      %v1190 = vrcp.pop %v1174
      %v1191 = vrcp.pop %v1175
      %v1192 = vrcp.pop %v1176
      %v1193 = vrcp.pop %v1177
      %v1194 = vrcp.pop %v1178
      %v1195 = vrcp.pop %v1179
      %v1196 = vrcp.pop %v1180
      %v1197 = vrcp.pop %v1181
      %v1198 = vrcp.pop %v1182
      %v1199 = vrcp.pop %v1183
      %v1200 = vrcp.pop %v1184
      %v1201 = vrcp.pop %v1185
      %v1202 = vmul.f32 %v1074, %v1186
      %v1203 = vmul.f32 %v1103, %v1187
      %v1204 = vmul.f32 %v1076, %v1188
      %v1205 = vmul.f32 %v1105, %v1189
      %v1206 = vmul.f32 %v1079, %v1190
      %v1207 = vmul.f32 %v1108, %v1191
      %v1208 = vmul.f32 %v1081, %v1192
      %v1209 = vmul.f32 %v1110, %v1193
      %v1210 = vmul.f32 %v1084, %v1194
      %v1211 = vmul.f32 %v1113, %v1195
      %v1212 = vmul.f32 %v1086, %v1196
      %v1213 = vmul.f32 %v1115, %v1197
      %v1214 = vmul.f32 %v1089, %v1198
      %v1215 = vmul.f32 %v1118, %v1199
      %v1216 = vmul.f32 %v1091, %v1200
      %v1217 = vmul.f32 %v1120, %v1201
      %v1218 = vld [vmem:[#allocation2 + $0x4] sm:$0x3]
      %v1219 = vadd.f32 %v1202, %v1204
      %v1220 = vadd.f32 %v1219, %v1206
      %v1221 = vadd.f32 %v1220, %v1208
      %v1222 = vadd.f32 %v1221, %v1210
      %v1223 = vadd.f32 %v1222, %v1212
      %v1224 = vadd.f32 %v1223, %v1214
      %v1225 = vadd.f32 %v1224, %v1216
      %v1226 = vrot.slane %v1225, 4
      %v1227 = vadd.f32 %v1225, %v1226
      %v1228 = vrot.slane %v1227, 2
      %v1229 = vadd.f32 %v1227, %v1228
      %v1230 = vrot.slane %v1229, 1
      %v1231 = vadd.f32 %v1229, %v1230
      %v1232 = vadd.f32 %v1203, %v1205
      %v1233 = vadd.f32 %v1232, %v1207
      %v1234 = vadd.f32 %v1233, %v1209
      %v1235 = vadd.f32 %v1234, %v1211
      %v1236 = vadd.f32 %v1235, %v1213
      %v1237 = vadd.f32 %v1236, %v1215
      %v1238 = vadd.f32 %v1237, %v1217
      %v1239 = vrot.slane %v1238, 4
      %v1240 = vadd.f32 %v1238, %v1239
      %v1241 = vrot.slane %v1240, 2
      %v1242 = vadd.f32 %v1240, %v1241
      %v1243 = vrot.slane %v1242, 1
      %v1244 = vadd.f32 %v1242, %v1243
      %v1247 = vrot.slane %v1244, 7
      %v1248 = vsel %vm807, %v1231, %v1247
      %v1250 = vadd.f32 %v1218, %v1248
      %1251 = vst.msk [vmem:[#allocation2 + $0x4] sm:$0x3] %vm814, %v1250
      %v1252 = vld [vmem:[%s3 + $0x18] sm:$0xff]
      %v1253 = vld [vmem:[%s3 + $0x40] sm:$0xff]
      %v1254 = vld [vmem:[%s3 + $0x68] sm:$0xff]
      %v1255 = vld [vmem:[%s3 + $0x90] sm:$0xff]
      %v1256 = vld [vmem:[%s4 + $0x6] sm:$0x3]
      %v1258 = vperm.slane %v1256, 0
      %v1259 = vperm.slane %v1256, 1
      %v1266 = vunpack.c.l.b16 %v1252
      %v1267 = vunpack.c.h.b16 %v1252
      %v1268 = vunpack.c.l.b16 %v1253
      %v1269 = vunpack.c.h.b16 %v1253
      %v1270 = vunpack.c.l.b16 %v1254
      %v1271 = vunpack.c.h.b16 %v1254
      %v1272 = vunpack.c.l.b16 %v1255
      %v1273 = vunpack.c.h.b16 %v1255
      %v1274 = vpack.c.b16 %v1268, %v1266
      %v1275 = vpack.c.b16 %v1269, %v1267
      %v1276 = vpack.c.b16 %v1272, %v1270
      %v1277 = vpack.c.b16 %v1273, %v1271
      %1282 = vmatpush.bf16.msra.mxu0 0
      %1283 = vmatpush.bf16.msra.mxu0 0
      %1284 = vmatpush.bf16.msra.mxu0 0
      %1285 = vmatpush.bf16.msra.mxu0 0
      %1286 = vmatpush.bf16.msra.mxu0 0
      %1287 = vmatpush.bf16.msra.mxu0 0
      %1288 = vmatpush.bf16.msra.mxu0 %v1276
      %1289 = vmatpush.bf16.msra.mxu0 %v1274
      %1290 = vmatmul.bf16.gmra.mxu0 %v612
      %v1291 = vpop.f32.mrf.mxu0
      %v1292 = vadd.f32 %v1258, %v1291
      %v1293 = vpop.f32.mrf.mxu0
      %v1294 = vadd.f32 %v1258, %v1293
      %1295 = vmatmul.bf16.gmra.mxu0 %v615
      %v1296 = vpop.f32.mrf.mxu0
      %v1297 = vadd.f32 %v1258, %v1296
      %v1298 = vpop.f32.mrf.mxu0
      %v1299 = vadd.f32 %v1258, %v1298
      %1300 = vmatmul.bf16.gmra.mxu0 %v618
      %v1301 = vpop.f32.mrf.mxu0
      %v1302 = vadd.f32 %v1258, %v1301
      %v1303 = vpop.f32.mrf.mxu0
      %v1304 = vadd.f32 %v1258, %v1303
      %1305 = vmatmul.bf16.gmra.mxu0 %v621
      %v1306 = vpop.f32.mrf.mxu0
      %v1307 = vadd.f32 %v1258, %v1306
      %v1308 = vpop.f32.mrf.mxu0
      %v1309 = vadd.f32 %v1258, %v1308
      %1310 = vdwg.mxu0
      %1311 = vmatpush.bf16.msra.mxu0 0
      %1312 = vmatpush.bf16.msra.mxu0 0
      %1313 = vmatpush.bf16.msra.mxu0 0
      %1314 = vmatpush.bf16.msra.mxu0 0
      %1315 = vmatpush.bf16.msra.mxu0 0
      %1316 = vmatpush.bf16.msra.mxu0 0
      %1317 = vmatpush.bf16.msra.mxu0 %v1277
      %1318 = vmatpush.bf16.msra.mxu0 %v1275
      %1319 = vmatmul.bf16.gmra.mxu0 %v612
      %v1320 = vpop.f32.mrf.mxu0
      %v1321 = vadd.f32 %v1259, %v1320
      %v1322 = vpop.f32.mrf.mxu0
      %v1323 = vadd.f32 %v1259, %v1322
      %1324 = vmatmul.bf16.gmra.mxu0 %v615
      %v1325 = vpop.f32.mrf.mxu0
      %v1326 = vadd.f32 %v1259, %v1325
      %v1327 = vpop.f32.mrf.mxu0
      %v1328 = vadd.f32 %v1259, %v1327
      %1329 = vmatmul.bf16.gmra.mxu0 %v618
      %v1330 = vpop.f32.mrf.mxu0
      %v1331 = vadd.f32 %v1259, %v1330
      %v1332 = vpop.f32.mrf.mxu0
      %v1333 = vadd.f32 %v1259, %v1332
      %1334 = vmatmul.bf16.gmra.mxu0 %v621
      %v1335 = vpop.f32.mrf.mxu0
      %v1336 = vadd.f32 %v1259, %v1335
      %v1337 = vpop.f32.mrf.mxu0
      %v1338 = vadd.f32 %v1259, %v1337
      %1339 = vdwg.mxu0
      %v1340 = vsub.f32 0.0, %v1292
      %v1341 = vsub.f32 0.0, %v1321
      %v1342 = vsub.f32 0.0, %v1294
      %v1343 = vsub.f32 0.0, %v1323
      %v1344 = vsub.f32 0.0, %v1297
      %v1345 = vsub.f32 0.0, %v1326
      %v1346 = vsub.f32 0.0, %v1299
      %v1347 = vsub.f32 0.0, %v1328
      %v1348 = vsub.f32 0.0, %v1302
      %v1349 = vsub.f32 0.0, %v1331
      %v1350 = vsub.f32 0.0, %v1304
      %v1351 = vsub.f32 0.0, %v1333
      %v1352 = vsub.f32 0.0, %v1307
      %v1353 = vsub.f32 0.0, %v1336
      %v1354 = vsub.f32 0.0, %v1309
      %v1355 = vsub.f32 0.0, %v1338
      %v1356 = vmul.f32 %v1340, 1.442695
      %v1357 = vpow.pop %v1356
      %v1358 = vmul.f32 %v1341, 1.442695
      %v1359 = vpow.pop %v1358
      %v1360 = vmul.f32 %v1342, 1.442695
      %v1361 = vpow.pop %v1360
      %v1362 = vmul.f32 %v1343, 1.442695
      %v1363 = vpow.pop %v1362
      %v1364 = vmul.f32 %v1344, 1.442695
      %v1365 = vpow.pop %v1364
      %v1366 = vmul.f32 %v1345, 1.442695
      %v1367 = vpow.pop %v1366
      %v1368 = vmul.f32 %v1346, 1.442695
      %v1369 = vpow.pop %v1368
      %v1370 = vmul.f32 %v1347, 1.442695
      %v1371 = vpow.pop %v1370
      %v1372 = vmul.f32 %v1348, 1.442695
      %v1373 = vpow.pop %v1372
      %v1374 = vmul.f32 %v1349, 1.442695
      %v1375 = vpow.pop %v1374
      %v1376 = vmul.f32 %v1350, 1.442695
      %v1377 = vpow.pop %v1376
      %v1378 = vmul.f32 %v1351, 1.442695
      %v1379 = vpow.pop %v1378
      %v1380 = vmul.f32 %v1352, 1.442695
      %v1381 = vpow.pop %v1380
      %v1382 = vmul.f32 %v1353, 1.442695
      %v1383 = vpow.pop %v1382
      %v1384 = vmul.f32 %v1354, 1.442695
      %v1385 = vpow.pop %v1384
      %v1386 = vmul.f32 %v1355, 1.442695
      %v1387 = vpow.pop %v1386
      %v1388 = vadd.f32 %v1357, 1.0
      %v1389 = vadd.f32 %v1359, 1.0
      %v1390 = vadd.f32 %v1361, 1.0
      %v1391 = vadd.f32 %v1363, 1.0
      %v1392 = vadd.f32 %v1365, 1.0
      %v1393 = vadd.f32 %v1367, 1.0
      %v1394 = vadd.f32 %v1369, 1.0
      %v1395 = vadd.f32 %v1371, 1.0
      %v1396 = vadd.f32 %v1373, 1.0
      %v1397 = vadd.f32 %v1375, 1.0
      %v1398 = vadd.f32 %v1377, 1.0
      %v1399 = vadd.f32 %v1379, 1.0
      %v1400 = vadd.f32 %v1381, 1.0
      %v1401 = vadd.f32 %v1383, 1.0
      %v1402 = vadd.f32 %v1385, 1.0
      %v1403 = vadd.f32 %v1387, 1.0
      %v1404 = vrcp.pop %v1388
      %v1405 = vrcp.pop %v1389
      %v1406 = vrcp.pop %v1390
      %v1407 = vrcp.pop %v1391
      %v1408 = vrcp.pop %v1392
      %v1409 = vrcp.pop %v1393
      %v1410 = vrcp.pop %v1394
      %v1411 = vrcp.pop %v1395
      %v1412 = vrcp.pop %v1396
      %v1413 = vrcp.pop %v1397
      %v1414 = vrcp.pop %v1398
      %v1415 = vrcp.pop %v1399
      %v1416 = vrcp.pop %v1400
      %v1417 = vrcp.pop %v1401
      %v1418 = vrcp.pop %v1402
      %v1419 = vrcp.pop %v1403
      %v1420 = vmul.f32 %v1292, %v1404
      %v1421 = vmul.f32 %v1321, %v1405
      %v1422 = vmul.f32 %v1294, %v1406
      %v1423 = vmul.f32 %v1323, %v1407
      %v1424 = vmul.f32 %v1297, %v1408
      %v1425 = vmul.f32 %v1326, %v1409
      %v1426 = vmul.f32 %v1299, %v1410
      %v1427 = vmul.f32 %v1328, %v1411
      %v1428 = vmul.f32 %v1302, %v1412
      %v1429 = vmul.f32 %v1331, %v1413
      %v1430 = vmul.f32 %v1304, %v1414
      %v1431 = vmul.f32 %v1333, %v1415
      %v1432 = vmul.f32 %v1307, %v1416
      %v1433 = vmul.f32 %v1336, %v1417
      %v1434 = vmul.f32 %v1309, %v1418
      %v1435 = vmul.f32 %v1338, %v1419
      %v1436 = vld [vmem:[#allocation2 + $0x6] sm:$0x3]
      %v1437 = vadd.f32 %v1420, %v1422
      %v1438 = vadd.f32 %v1437, %v1424
      %v1439 = vadd.f32 %v1438, %v1426
      %v1440 = vadd.f32 %v1439, %v1428
      %v1441 = vadd.f32 %v1440, %v1430
      %v1442 = vadd.f32 %v1441, %v1432
      %v1443 = vadd.f32 %v1442, %v1434
      %v1444 = vrot.slane %v1443, 4
      %v1445 = vadd.f32 %v1443, %v1444
      %v1446 = vrot.slane %v1445, 2
      %v1447 = vadd.f32 %v1445, %v1446
      %v1448 = vrot.slane %v1447, 1
      %v1449 = vadd.f32 %v1447, %v1448
      %v1450 = vadd.f32 %v1421, %v1423
      %v1451 = vadd.f32 %v1450, %v1425
      %v1452 = vadd.f32 %v1451, %v1427
      %v1453 = vadd.f32 %v1452, %v1429
      %v1454 = vadd.f32 %v1453, %v1431
      %v1455 = vadd.f32 %v1454, %v1433
      %v1456 = vadd.f32 %v1455, %v1435
      %v1457 = vrot.slane %v1456, 4
      %v1458 = vadd.f32 %v1456, %v1457
      %v1459 = vrot.slane %v1458, 2
      %v1460 = vadd.f32 %v1458, %v1459
      %v1461 = vrot.slane %v1460, 1
      %v1462 = vadd.f32 %v1460, %v1461
      %v1465 = vrot.slane %v1462, 7
      %v1466 = vsel %vm807, %v1449, %v1465
      %v1468 = vadd.f32 %v1436, %v1466
      %1469 = vst.msk [vmem:[#allocation2 + $0x6] sm:$0x3] %vm814, %v1468
      %v1470 = vld [vmem:[%s3 + $0x20] sm:$0xff]
      %v1471 = vld [vmem:[%s3 + $0x48] sm:$0xff]
      %v1472 = vld [vmem:[%s3 + $0x70] sm:$0xff]
      %v1473 = vld [vmem:[%s3 + $0x98] sm:$0xff]
      %v1474 = vld [vmem:[%s4 + $0x8] sm:$0x3]
      %v1476 = vperm.slane %v1474, 0
      %v1477 = vperm.slane %v1474, 1
      %v1484 = vunpack.c.l.b16 %v1470
      %v1485 = vunpack.c.h.b16 %v1470
      %v1486 = vunpack.c.l.b16 %v1471
      %v1487 = vunpack.c.h.b16 %v1471
      %v1488 = vunpack.c.l.b16 %v1472
      %v1489 = vunpack.c.h.b16 %v1472
      %v1490 = vunpack.c.l.b16 %v1473
      %v1491 = vunpack.c.h.b16 %v1473
      %v1492 = vpack.c.b16 %v1486, %v1484
      %v1493 = vpack.c.b16 %v1487, %v1485
      %v1494 = vpack.c.b16 %v1490, %v1488
      %v1495 = vpack.c.b16 %v1491, %v1489
      %1500 = vmatpush.bf16.msra.mxu0 0
      %1501 = vmatpush.bf16.msra.mxu0 0
      %1502 = vmatpush.bf16.msra.mxu0 0
      %1503 = vmatpush.bf16.msra.mxu0 0
      %1504 = vmatpush.bf16.msra.mxu0 0
      %1505 = vmatpush.bf16.msra.mxu0 0
      %1506 = vmatpush.bf16.msra.mxu0 %v1494
      %1507 = vmatpush.bf16.msra.mxu0 %v1492
      %1508 = vmatmul.bf16.gmra.mxu0 %v612
      %v1509 = vpop.f32.mrf.mxu0
      %v1510 = vadd.f32 %v1476, %v1509
      %v1511 = vpop.f32.mrf.mxu0
      %v1512 = vadd.f32 %v1476, %v1511
      %1513 = vmatmul.bf16.gmra.mxu0 %v615
      %v1514 = vpop.f32.mrf.mxu0
      %v1515 = vadd.f32 %v1476, %v1514
      %v1516 = vpop.f32.mrf.mxu0
      %v1517 = vadd.f32 %v1476, %v1516
      %1518 = vmatmul.bf16.gmra.mxu0 %v618
      %v1519 = vpop.f32.mrf.mxu0
      %v1520 = vadd.f32 %v1476, %v1519
      %v1521 = vpop.f32.mrf.mxu0
      %v1522 = vadd.f32 %v1476, %v1521
      %1523 = vmatmul.bf16.gmra.mxu0 %v621
      %v1524 = vpop.f32.mrf.mxu0
      %v1525 = vadd.f32 %v1476, %v1524
      %v1526 = vpop.f32.mrf.mxu0
      %v1527 = vadd.f32 %v1476, %v1526
      %1528 = vdwg.mxu0
      %1529 = vmatpush.bf16.msra.mxu0 0
      %1530 = vmatpush.bf16.msra.mxu0 0
      %1531 = vmatpush.bf16.msra.mxu0 0
      %1532 = vmatpush.bf16.msra.mxu0 0
      %1533 = vmatpush.bf16.msra.mxu0 0
      %1534 = vmatpush.bf16.msra.mxu0 0
      %1535 = vmatpush.bf16.msra.mxu0 %v1495
      %1536 = vmatpush.bf16.msra.mxu0 %v1493
      %1537 = vmatmul.bf16.gmra.mxu0 %v612
      %v1538 = vpop.f32.mrf.mxu0
      %v1539 = vadd.f32 %v1477, %v1538
      %v1540 = vpop.f32.mrf.mxu0
      %v1541 = vadd.f32 %v1477, %v1540
      %1542 = vmatmul.bf16.gmra.mxu0 %v615
      %v1543 = vpop.f32.mrf.mxu0
      %v1544 = vadd.f32 %v1477, %v1543
      %v1545 = vpop.f32.mrf.mxu0
      %v1546 = vadd.f32 %v1477, %v1545
      %1547 = vmatmul.bf16.gmra.mxu0 %v618
      %v1548 = vpop.f32.mrf.mxu0
      %v1549 = vadd.f32 %v1477, %v1548
      %v1550 = vpop.f32.mrf.mxu0
      %v1551 = vadd.f32 %v1477, %v1550
      %1552 = vmatmul.bf16.gmra.mxu0 %v621
      %v1553 = vpop.f32.mrf.mxu0
      %v1554 = vadd.f32 %v1477, %v1553
      %v1555 = vpop.f32.mrf.mxu0
      %v1556 = vadd.f32 %v1477, %v1555
      %1557 = vdwg.mxu0
      %v1558 = vsub.f32 0.0, %v1510
      %v1559 = vsub.f32 0.0, %v1539
      %v1560 = vsub.f32 0.0, %v1512
      %v1561 = vsub.f32 0.0, %v1541
      %v1562 = vsub.f32 0.0, %v1515
      %v1563 = vsub.f32 0.0, %v1544
      %v1564 = vsub.f32 0.0, %v1517
      %v1565 = vsub.f32 0.0, %v1546
      %v1566 = vsub.f32 0.0, %v1520
      %v1567 = vsub.f32 0.0, %v1549
      %v1568 = vsub.f32 0.0, %v1522
      %v1569 = vsub.f32 0.0, %v1551
      %v1570 = vsub.f32 0.0, %v1525
      %v1571 = vsub.f32 0.0, %v1554
      %v1572 = vsub.f32 0.0, %v1527
      %v1573 = vsub.f32 0.0, %v1556
      %v1574 = vmul.f32 %v1558, 1.442695
      %v1575 = vpow.pop %v1574
      %v1576 = vmul.f32 %v1559, 1.442695
      %v1577 = vpow.pop %v1576
      %v1578 = vmul.f32 %v1560, 1.442695
      %v1579 = vpow.pop %v1578
      %v1580 = vmul.f32 %v1561, 1.442695
      %v1581 = vpow.pop %v1580
      %v1582 = vmul.f32 %v1562, 1.442695
      %v1583 = vpow.pop %v1582
      %v1584 = vmul.f32 %v1563, 1.442695
      %v1585 = vpow.pop %v1584
      %v1586 = vmul.f32 %v1564, 1.442695
      %v1587 = vpow.pop %v1586
      %v1588 = vmul.f32 %v1565, 1.442695
      %v1589 = vpow.pop %v1588
      %v1590 = vmul.f32 %v1566, 1.442695
      %v1591 = vpow.pop %v1590
      %v1592 = vmul.f32 %v1567, 1.442695
      %v1593 = vpow.pop %v1592
      %v1594 = vmul.f32 %v1568, 1.442695
      %v1595 = vpow.pop %v1594
      %v1596 = vmul.f32 %v1569, 1.442695
      %v1597 = vpow.pop %v1596
      %v1598 = vmul.f32 %v1570, 1.442695
      %v1599 = vpow.pop %v1598
      %v1600 = vmul.f32 %v1571, 1.442695
      %v1601 = vpow.pop %v1600
      %v1602 = vmul.f32 %v1572, 1.442695
      %v1603 = vpow.pop %v1602
      %v1604 = vmul.f32 %v1573, 1.442695
      %v1605 = vpow.pop %v1604
      %v1606 = vadd.f32 %v1575, 1.0
      %v1607 = vadd.f32 %v1577, 1.0
      %v1608 = vadd.f32 %v1579, 1.0
      %v1609 = vadd.f32 %v1581, 1.0
      %v1610 = vadd.f32 %v1583, 1.0
      %v1611 = vadd.f32 %v1585, 1.0
      %v1612 = vadd.f32 %v1587, 1.0
      %v1613 = vadd.f32 %v1589, 1.0
      %v1614 = vadd.f32 %v1591, 1.0
      %v1615 = vadd.f32 %v1593, 1.0
      %v1616 = vadd.f32 %v1595, 1.0
      %v1617 = vadd.f32 %v1597, 1.0
      %v1618 = vadd.f32 %v1599, 1.0
      %v1619 = vadd.f32 %v1601, 1.0
      %v1620 = vadd.f32 %v1603, 1.0
      %v1621 = vadd.f32 %v1605, 1.0
      %v1622 = vrcp.pop %v1606
      %v1623 = vrcp.pop %v1607
      %v1624 = vrcp.pop %v1608
      %v1625 = vrcp.pop %v1609
      %v1626 = vrcp.pop %v1610
      %v1627 = vrcp.pop %v1611
      %v1628 = vrcp.pop %v1612
      %v1629 = vrcp.pop %v1613
      %v1630 = vrcp.pop %v1614
      %v1631 = vrcp.pop %v1615
      %v1632 = vrcp.pop %v1616
      %v1633 = vrcp.pop %v1617
      %v1634 = vrcp.pop %v1618
      %v1635 = vrcp.pop %v1619
      %v1636 = vrcp.pop %v1620
      %v1637 = vrcp.pop %v1621
      %v1638 = vmul.f32 %v1510, %v1622
      %v1639 = vmul.f32 %v1539, %v1623
      %v1640 = vmul.f32 %v1512, %v1624
      %v1641 = vmul.f32 %v1541, %v1625
      %v1642 = vmul.f32 %v1515, %v1626
      %v1643 = vmul.f32 %v1544, %v1627
      %v1644 = vmul.f32 %v1517, %v1628
      %v1645 = vmul.f32 %v1546, %v1629
      %v1646 = vmul.f32 %v1520, %v1630
      %v1647 = vmul.f32 %v1549, %v1631
      %v1648 = vmul.f32 %v1522, %v1632
      %v1649 = vmul.f32 %v1551, %v1633
      %v1650 = vmul.f32 %v1525, %v1634
      %v1651 = vmul.f32 %v1554, %v1635
      %v1652 = vmul.f32 %v1527, %v1636
      %v1653 = vmul.f32 %v1556, %v1637
      %v1654 = vld [vmem:[#allocation2 + $0x8] sm:$0x3]
      %v1655 = vadd.f32 %v1638, %v1640
      %v1656 = vadd.f32 %v1655, %v1642
      %v1657 = vadd.f32 %v1656, %v1644
      %v1658 = vadd.f32 %v1657, %v1646
      %v1659 = vadd.f32 %v1658, %v1648
      %v1660 = vadd.f32 %v1659, %v1650
      %v1661 = vadd.f32 %v1660, %v1652
      %v1662 = vrot.slane %v1661, 4
      %v1663 = vadd.f32 %v1661, %v1662
      %v1664 = vrot.slane %v1663, 2
      %v1665 = vadd.f32 %v1663, %v1664
      %v1666 = vrot.slane %v1665, 1
      %v1667 = vadd.f32 %v1665, %v1666
      %v1668 = vadd.f32 %v1639, %v1641
      %v1669 = vadd.f32 %v1668, %v1643
      %v1670 = vadd.f32 %v1669, %v1645
      %v1671 = vadd.f32 %v1670, %v1647
      %v1672 = vadd.f32 %v1671, %v1649
      %v1673 = vadd.f32 %v1672, %v1651
      %v1674 = vadd.f32 %v1673, %v1653
      %v1675 = vrot.slane %v1674, 4
      %v1676 = vadd.f32 %v1674, %v1675
      %v1677 = vrot.slane %v1676, 2
      %v1678 = vadd.f32 %v1676, %v1677
      %v1679 = vrot.slane %v1678, 1
      %v1680 = vadd.f32 %v1678, %v1679
      %v1683 = vrot.slane %v1680, 7
      %v1684 = vsel %vm807, %v1667, %v1683
      %v1686 = vadd.f32 %v1654, %v1684
      %1687 = vst.msk [vmem:[#allocation2 + $0x8] sm:$0x3] %vm814, %v1686
      // Predicated region
      $region45: #{efficient_network_forward.1} parent=39 // pred_check
        %p1688 = pneg %p236
      $region46: #{efficient_network_forward.1} parent=39 // pred_check_branch
        %1690 = sbr.rel (%p1688) target = $region48
      $region47: #{efficient_network_forward.1} parent=39 // pred_region
        %v1691 = vld [vmem:[#allocation2] sm:$0xff]
        %v1692 = vld [vmem:[#allocation2 + $0x8] sm:$0x3]
        %v1693 = vmul.f32 %v1691, 0.015625
        %v1694 = vmul.f32 %v1692, 0.015625
        %1695 = vst [vmem:[%s234] sm:$0xff] %v1693
        %1696 = vst.msk [vmem:[%s234 + $0x8] sm:$0x3] %vm814, %v1694
      $region48: #{efficient_network_forward.1} parent=39 // pred_fallthru
        _
      %p1697 = scmp.lt.s32.totalorder %s20, 1
      %s1698 = scalar_select %p1697, %s20, 1
      %s1699 = smul.addr %s1698, 10
      %s1700 = scalar_lea.vmem %s5, %s1699
      // Predicated region
      $region49: #{efficient_network_forward.1} parent=39 // pred_check
        %p1701 = pneg %p156
      $region50: #{efficient_network_forward.1} parent=39 // pred_check_branch
        %1703 = sbr.rel (%p1701) target = $region52
      $region51: #{efficient_network_forward.1} parent=39 // pred_region
        _
      $region52: #{efficient_network_forward.1} parent=39 // pred_fallthru
        _
    $region40: #{efficient_network_forward.1} parent=5 // pred_fallthru
      _
    %p1704 = scmp.le.s32.totalorder 2, %s11
    // Predicated region
    $region53: #{efficient_network_forward.1} parent=5 // pred_check
      %p1705 = pneg %p1704
    $region54: #{efficient_network_forward.1} parent=5 // pred_check_branch
      %1707 = sbr.rel (%p1705) target = $region56
    $region55: #{efficient_network_forward.1} parent=5 // pred_region
      %s1708 = ssub.s32 %s11, 2
      // Predicated region
      $region57: #{efficient_network_forward.1} parent=55 // pred_check
        %p1709 = pneg %p162
      $region58: #{efficient_network_forward.1} parent=55 // pred_check_branch
        %1711 = sbr.rel (%p1709) target = $region60
      $region59: #{efficient_network_forward.1} parent=55 // pred_region
        %p1712 = scmp.lt.s32.totalorder %s22, 1
        %s1713 = scalar_select %p1712, %s22, 1
        %s1714 = smul.addr %s1713, 10
        %s1715 = scalar_lea.vmem %s5, %s1714
      $region60: #{efficient_network_forward.1} parent=55 // pred_fallthru
        _
    $region56: #{efficient_network_forward.1} parent=5 // pred_fallthru
      _
  $region6: #{efficient_network_forward.1} parent=0 // loop_footer
    %s15 = sadd.s32 1, %s11
  $region7: #{efficient_network_forward.1} parent=0 // loop_footer_branch
    %10 = sbr.rel target = $region3
  $region8: #{efficient_network_forward.1} parent=0 // loop_exit
    _

</llo_original>
